<compile_context>
chip_gen: v6e
topology: v6e:2x2x1
jax: 0.10.0
libtpu: 0.0.40
codegen_flags: <defaults>
</compile_context>

<pallas_src>
import math
from functools import partial

import jax
import jax.numpy as jnp
from jax.experimental import pallas as pl
from jax.experimental.pallas import tpu as pltpu


# ----------------------------------------------------------------------------
# Deterministic gaussian-orthogonal random projection (module __init__ buffer)
# ----------------------------------------------------------------------------
def gaussian_orthogonal_random_matrix(key, nb_rows, nb_columns, scaling=0):
    nb_full_blocks = nb_rows // nb_columns
    keys = jax.random.split(key, nb_full_blocks + 2)
    blocks = []
    for i in range(nb_full_blocks):
        u = jax.random.normal(keys[i], (nb_columns, nb_columns), dtype=jnp.float32)
        qm, _ = jnp.linalg.qr(u)
        blocks.append(qm.T)
    remaining = nb_rows - nb_full_blocks * nb_columns
    if remaining > 0:
        u = jax.random.normal(keys[nb_full_blocks], (nb_columns, nb_columns),
                              dtype=jnp.float32)
        qm, _ = jnp.linalg.qr(u)
        blocks.append(qm.T[:remaining])
    final_matrix = jnp.concatenate(blocks, axis=0)
    if scaling == 0:
        multiplier = jnp.linalg.norm(
            jax.random.normal(keys[-1], (nb_rows, nb_columns), dtype=jnp.float32),
            axis=1)
    elif scaling == 1:
        multiplier = math.sqrt(float(nb_columns)) * jnp.ones((nb_rows,), jnp.float32)
    else:
        raise ValueError(f"Invalid scaling {scaling}")
    return multiplier[:, None] * final_matrix  # == diag(multiplier) @ final_matrix


# ----------------------------------------------------------------------------
# One-time projection prep (module init): fold data_normalizer, pad features to
# a multiple of 128, pre-transpose to (D, Mp).
# ----------------------------------------------------------------------------
def prepare_projection(projection_matrix, dim_heads):
    m, d = projection_matrix.shape
    assert d == dim_heads
    mp = ((m + 127) // 128) * 128
    scaled = projection_matrix.astype(jnp.float32) * (float(dim_heads) ** -0.25)
    padded = jnp.pad(scaled, ((0, mp - m), (0, 0)))
    return jnp.asarray(padded.T), m          # (D, Mp), real feature count


# ----------------------------------------------------------------------------
# Pallas kernel: two-phase (K/V accumulate, then Q emit) linear attention
# ----------------------------------------------------------------------------
def _fast_attention_kernel(q_ref, k_ref, v_ref, projt_ref, o_ref,
                           ctx_acc, vsum_acc, kmax_acc, *,
                           m_real, mxu_dtype, approx_recip):
    g_sz, tn, d = q_ref.shape
    mp = projt_ref.shape[1]

    j = pl.program_id(1)
    n_k_steps = pl.num_programs(1) // 2

    dn2 = float(d) ** (-0.5)                  # data_normalizer ** 2
    ratio = float(m_real) ** (-0.5)
    log_ratio = -0.5 * math.log(float(m_real))
    eps = 1e-4
    neg_big = -1e30
    low_prec = (mxu_dtype != jnp.float32)

    pt_c = projt_ref[...].astype(mxu_dtype)   # (D, Mp), pre-scaled by d**-0.25

    if mp > m_real:
        lane_mask = jax.lax.broadcasted_iota(jnp.int32, (1, 1, mp), 2) < m_real
    else:
        lane_mask = None

    def project(x):                            # (G, Tn, D) -> (G, Tn, Mp) f32
        dash = jnp.einsum('gnd,dm->gnm', x.astype(mxu_dtype), pt_c,
                          preferred_element_type=jnp.float32)
        if lane_mask is not None:
            # Padded feature columns -> -big so they vanish after exp.
            dash = jnp.where(lane_mask, dash, neg_big)
        return dash

    # ---- init accumulators at the start of every head group -----------------
    @pl.when(j == 0)
    def _init():
        ctx_acc[...] = jnp.zeros_like(ctx_acc)
        vsum_acc[...] = jnp.zeros_like(vsum_acc)
        kmax_acc[...] = jnp.full(kmax_acc.shape, -jnp.inf, dtype=kmax_acc.dtype)

    # ---- phase 1: stream K/V tiles, accumulate context with online k-max ----
    @pl.when(j < n_k_steps)
    def _k_step():
        k = k_ref[...]
        v = v_ref[...]
        k32 = k.astype(jnp.float32)
        k_dash = project(k)                                         # (G,Tn,Mp) f32
        diag_k = (0.5 * dn2) * jnp.sum(k32 * k32, axis=-1, keepdims=True)

        tile_max = jnp.max(jnp.max(k_dash, axis=-1, keepdims=True),
                           axis=-2, keepdims=True)                  # (G,1,1)
        m_old = kmax_acc[...]
        m_new = jnp.maximum(m_old, tile_max)
        kmax_acc[...] = m_new
        rescale = jnp.exp(m_old - m_new)                            # (G,1,1)

        arg = k_dash - (diag_k + m_new)                             # <= 0
        e_k = jnp.exp(arg.astype(mxu_dtype)) if low_prec else jnp.exp(arg)

        ones = jnp.ones((g_sz, tn, 1), dtype=v.dtype)
        v_aug = jnp.concatenate([v, ones], axis=-1)                 # (G,Tn,D+1)

        ctx_new = jnp.einsum('gnm,gnd->gmd', e_k, v_aug.astype(e_k.dtype),
                             preferred_element_type=jnp.float32)    # (G,Mp,D+1)
        ctx_acc[...] = ctx_acc[...] * rescale + ctx_new
        vsum_acc[...] = vsum_acc[...] + jnp.sum(
            v_aug.astype(jnp.float32), axis=1, keepdims=True)       # (G,1,D+1)

    # ---- finalize the augmented context once all of K has been seen ----------
    @pl.when(j == n_k_steps)
    def _finalize():
        if mp > m_real:
            sub_mask = jax.lax.broadcasted_iota(jnp.int32, (1, mp, 1), 1) < m_real
            eps_col = jnp.where(sub_mask, ratio * eps, 0.0)         # (1,Mp,1)
        else:
            eps_col = jnp.float32(ratio * eps)
        # context_aug = k'^T [v | 1] with k' = ratio*(exp(.) + eps), exactly.
        ctx_acc[...] = ratio * ctx_acc[...] + eps_col * vsum_acc[...]

    # ---- phase 2: stream Q tiles, emit output --------------------------------
    @pl.when(j >= n_k_steps)
    def _q_step():
        q = q_ref[...]
        q32 = q.astype(jnp.float32)
        q_dash = project(q)                                         # (G,Tn,Mp) f32
        diag_q = (0.5 * dn2) * jnp.sum(q32 * q32, axis=-1, keepdims=True)
        q_max = jnp.max(q_dash, axis=-1, keepdims=True)             # (G,Tn,1)

        if lane_mask is not None:
            eps_row = jnp.where(lane_mask, ratio * eps, 0.0)        # (1,1,Mp)
        else:
            eps_row = jnp.full((1, 1, mp), ratio * eps, jnp.float32)

        # ratio * (exp(x) + eps) == exp(x + log(ratio)) + ratio * eps
        arg = q_dash - (diag_q + q_max - log_ratio)
        if low_prec:
            q_prime = jnp.exp(arg.astype(mxu_dtype)) + eps_row.astype(mxu_dtype)
        else:
            q_prime = jnp.exp(arg) + eps_row

        ctx = ctx_acc[...]                                          # (G,Mp,D+1)
        out_aug = jnp.einsum('gnm,gmd->gnd',
                             q_prime.astype(mxu_dtype), ctx.astype(mxu_dtype),
                             preferred_element_type=jnp.float32)    # (G,Tn,D+1)
        num = out_aug[..., :d]
        den = out_aug[..., d:]
        den = jnp.where(den == 0.0, 1e-5, den)
        inv = pl.reciprocal(den, approx=True) if approx_recip else 1.0 / den
        o_ref[...] = (num * inv).astype(o_ref.dtype)


# ----------------------------------------------------------------------------
# Tiling / sizing heuristics
# ----------------------------------------------------------------------------
def _pick_seq_tile(n, max_tile):
    if n <= max_tile:
        return n
    t0 = max_tile - (max_tile % 8)
    for t in range(t0, 7, -8):
        if n % t == 0:
            return t
    # TODO(synk): sequence lengths with no multiple-of-8 divisor <= max_tile fall
    #             back to a single whole-sequence tile (must fit VMEM).
    return n


def _pick_group_size(bh, tn, mp, max_elems=1 << 20):
    best = 1
    for g in range(1, bh + 1):
        if bh % g:
            continue
        if bh >= 2 and bh // g < 2:
            continue   # keep the parallel grid length >= 2 (v7x has 2 TensorCores)
        if g * tn * mp <= max_elems:   # bound the (G,Tn,Mp) f32 working set
            best = g
    return best


def _vmem_limit_bytes():
    try:
        cap = int(pltpu.get_tpu_info().vmem_capacity_bytes)
    except Exception:
        cap = 64 << 20          # conservative fallback: v7x per-TensorCore VMEM
    # ~3/4 of physical VMEM: ~48 MiB on v7x, ~96 MiB on v5e / v6e.
    return int(max(min(cap * 3 // 4, 100 << 20), 32 << 20))


# ----------------------------------------------------------------------------
# Wrapper
# ----------------------------------------------------------------------------
def fast_attention(q, k, v, proj_t, nb_features, *,
                   mxu_dtype=jnp.bfloat16, approx_reciprocal=True,
                   block_n=512, out_dtype=None):
    """Performer FastAttention forward (softmax-kernel path).

    q, k, v: [B, H, N, D]; proj_t: (D, Mp) from prepare_projection.
    """
    B, H, N, D = q.shape
    Dp, Mp = proj_t.shape
    assert Dp == D, "projection must come from prepare_projection(...)"
    BH = B * H
    out_dtype = out_dtype if out_dtype is not None else q.dtype

    # Fast path: stream q/k/v as bf16 (HBM-bound kernel -> ~2x fewer input bytes).
    in_dtype = jnp.bfloat16 if mxu_dtype == jnp.bfloat16 else q.dtype
    qf = q.reshape(BH, N, D).astype(in_dtype)
    kf = k.reshape(BH, N, D).astype(in_dtype)
    vf = v.reshape(BH, N, D).astype(in_dtype)

    tn = _pick_seq_tile(N, block_n)
    nN = N // tn
    G = _pick_group_size(BH, tn, Mp)

    kern = partial(_fast_attention_kernel,
                   m_real=int(nb_features),
                   mxu_dtype=mxu_dtype,
                   approx_recip=approx_reciprocal)

    grid = (BH // G, 2 * nN)   # axis 1: nN K/V-accumulate steps then nN Q-emit steps

    out = pl.pallas_call(
        kern,
        out_shape=jax.ShapeDtypeStruct((BH, N, D), out_dtype),
        grid=grid,
        in_specs=[
            pl.BlockSpec((G, tn, D), lambda i, j: (i, jnp.maximum(j - nN, 0), 0)),
            pl.BlockSpec((G, tn, D), lambda i, j: (i, jnp.minimum(j, nN - 1), 0)),
            pl.BlockSpec((G, tn, D), lambda i, j: (i, jnp.minimum(j, nN - 1), 0)),
            pl.BlockSpec((D, Mp), lambda i, j: (0, 0)),   # resident, never re-fetched
        ],
        out_specs=pl.BlockSpec((G, tn, D),
                               lambda i, j: (i, jnp.maximum(j - nN, 0), 0)),
        scratch_shapes=[
            pltpu.VMEM((G, Mp, D + 1), jnp.float32),   # context_aug accumulator
            pltpu.VMEM((G, 1, D + 1), jnp.float32),    # sum_n [v | 1]
            pltpu.VMEM((G, 1, 1), jnp.float32),        # running per-head k max
        ],
        compiler_params=pltpu.CompilerParams(
            dimension_semantics=("parallel", "arbitrary"),
            vmem_limit_bytes=_vmem_limit_bytes()),
    )(qf, kf, vf, proj_t)

    # No post-kernel HBM transpose: kernel writes [BH, N, D]; reshaping leading
    # axes back to [B, H, N, D] is free.
    return out.reshape(B, H, N, D)


# ----------------------------------------------------------------------------
# Pure-JAX reference (mirrors the PyTorch module exactly) for validation
# ----------------------------------------------------------------------------
def _reference(q, k, v, proj):
    d = q.shape[-1]
    m = proj.shape[0]
    norm = float(d) ** (-0.25)
    ratio = float(m) ** (-0.5)
    eps = 1e-4

    def feat(x, is_query):
        dash = jnp.einsum("bhid,jd->bhij", norm * x, proj)
        diag = jnp.sum(x * x, axis=-1, keepdims=True) * 0.5 * norm ** 2
        if is_query:
            mx = jnp.max(dash, axis=-1, keepdims=True)
        else:
            mx = jnp.max(dash, axis=(-1, -2), keepdims=True)
        return ratio * (jnp.exp(dash - diag - mx) + eps)

    qp, kp = feat(q, True), feat(k, False)
    k_cumsum = kp.sum(axis=-2)
    D = jnp.einsum("bhnd,bhd->bhn", qp, k_cumsum)
    D = jnp.where(D == 0.0, 1e-5, D)
    D_inv = 1.0 / D
    context = jnp.einsum("bhnd,bhne->bhde", kp, v)
    return jnp.einsum("bhde,bhnd,bhn->bhne", context, qp, D_inv)


def _check(name, got, want, atol, rtol):
    if not bool(jnp.allclose(got, want, atol=atol, rtol=rtol)):
        err = float(jnp.max(jnp.abs(got - want)))
        raise AssertionError(
            f"{name}: max|diff|={err:.3e} exceeds atol={atol}, rtol={rtol}")


if __name__ == "__main__":
    B, H, dim_heads = 2, 2, 32
    nb_features = int(dim_heads * math.log(dim_heads))   # = 110, as in the module

    keys = jax.random.split(jax.random.PRNGKey(0), 8)
    proj = gaussian_orthogonal_random_matrix(keys[0], nb_features, dim_heads,
                                             scaling=0)
    proj_t, m_real = prepare_projection(proj, dim_heads)   # one-time init prep

    # --- small case: whole sequence in a single tile --------------------------
    N = 8
    q = jax.random.normal(keys[1], (B, H, N, dim_heads), dtype=jnp.float32)
    k = jax.random.normal(keys[2], (B, H, N, dim_heads), dtype=jnp.float32)
    v = jax.random.normal(keys[3], (B, H, N, dim_heads), dtype=jnp.float32)
    ref = _reference(q, k, v, proj)

    out_f32 = jax.block_until_ready(
        fast_attention(q, k, v, proj_t, m_real,
                       mxu_dtype=jnp.float32, approx_reciprocal=False))
    assert out_f32.shape == (B, H, N, dim_heads)
    _check("f32 path (N=8)", out_f32, ref, atol=1e-3, rtol=1e-3)

    out_fast = jax.block_until_ready(fast_attention(q, k, v, proj_t, m_real))
    _check("bf16 fast path (N=8)", out_fast, ref, atol=1e-1, rtol=1e-1)

    # --- larger case: exercises the sequence tiling + online k-max path -------
    N = 256
    q2 = jax.random.normal(keys[4], (B, H, N, dim_heads), dtype=jnp.float32)
    k2 = jax.random.normal(keys[5], (B, H, N, dim_heads), dtype=jnp.float32)
    v2 = jax.random.normal(keys[6], (B, H, N, dim_heads), dtype=jnp.float32)
    ref2 = _reference(q2, k2, v2, proj)

    out2_f32 = jax.block_until_ready(
        fast_attention(q2, k2, v2, proj_t, m_real, block_n=64,
                       mxu_dtype=jnp.float32, approx_reciprocal=False))
    _check("f32 path (N=256, tiled)", out2_f32, ref2, atol=2e-2, rtol=2e-2)

    out2_fast = jax.block_until_ready(
        fast_attention(q2, k2, v2, proj_t, m_real, block_n=64))
    _check("bf16 fast path (N=256, tiled)", out2_fast, ref2, atol=2e-1, rtol=2e-1)

    print("KERNEL_OK")
</pallas_src>

<mosaic_0001>
module attributes {stable_mosaic.version = 11 : i64} {
  func.func @_fast_attention_kernel(%arg0: i32, %arg1: i32, %arg2: memref<2x8x32xf32, #tpu.memory_space<vmem>>, %arg3: memref<2x8x32xf32, #tpu.memory_space<vmem>>, %arg4: memref<2x8x32xf32, #tpu.memory_space<vmem>>, %arg5: memref<32x128xf32, #tpu.memory_space<vmem>>, %arg6: memref<2x8x32xf32, #tpu.memory_space<vmem>>, %arg7: memref<2x128x33xf32, #tpu.memory_space<vmem>>, %arg8: memref<2x1x33xf32, #tpu.memory_space<vmem>>, %arg9: memref<2x1x1xf32, #tpu.memory_space<vmem>>) attributes {dimension_semantics = [#tpu.dimension_semantics<parallel>, #tpu.dimension_semantics<arbitrary>], iteration_bounds = array<i64: 2, 2>, scalar_prefetch = 0 : i64, scratch_operands = 3 : i64, tpu.core_type = #tpu.core_type<tc>, window_params = [{transform_indices = @transform_0, window_bounds = array<i64: 2, 8, 32>}, {transform_indices = @transform_1, window_bounds = array<i64: 2, 8, 32>}, {transform_indices = @transform_2, window_bounds = array<i64: 2, 8, 32>}, {pipeline_mode = #tpu.pipeline_mode<synchronous>, transform_indices = @transform_3, window_bounds = array<i64: 32, 128>}, {transform_indices = @transform_4, window_bounds = array<i64: 2, 8, 32>}]} {
    %c0 = arith.constant 0 : index
    %c0_0 = arith.constant 0 : index
    %0 = vector.load %arg5[%c0, %c0_0] : memref<32x128xf32, #tpu.memory_space<vmem>>, vector<32x128xf32>
    %1 = tpu.iota {dimensions = array<i32: 2>} : vector<1x1x128xi32>
    %c110_i32 = arith.constant 110 : i32
    %2 = vector.broadcast %c110_i32 : i32 to vector<1x1x128xi32>
    %3 = arith.cmpi slt, %1, %2 : vector<1x1x128xi32>
    %c0_i32 = arith.constant 0 : i32
    %4 = arith.cmpi eq, %arg1, %c0_i32 : i32
    %5 = arith.extui %4 : i1 to i32
    %c0_i32_1 = arith.constant 0 : i32
    %6 = arith.cmpi ne, %5, %c0_i32_1 : i32
    scf.if %6 {
      %cst = arith.constant 0.000000e+00 : f32
      %16 = vector.broadcast %cst : f32 to vector<2x128x33xf32>
      %c0_7 = arith.constant 0 : index
      %c0_8 = arith.constant 0 : index
      %c0_9 = arith.constant 0 : index
      %17 = vector.load %arg7[%c0_7, %c0_8, %c0_9] : memref<2x128x33xf32, #tpu.memory_space<vmem>>, vector<2x128x33xf32>
      tpu.vector_store %arg7[%c0_7, %c0_8, %c0_9], %16 {strides = array<i32>} : memref<2x128x33xf32, #tpu.memory_space<vmem>>, vector<2x128x33xf32>,
      %cst_10 = arith.constant 0.000000e+00 : f32
      %18 = vector.broadcast %cst_10 : f32 to vector<2x1x33xf32>
      %c0_11 = arith.constant 0 : index
      %c0_12 = arith.constant 0 : index
      %c0_13 = arith.constant 0 : index
      %19 = vector.load %arg8[%c0_11, %c0_12, %c0_13] : memref<2x1x33xf32, #tpu.memory_space<vmem>>, vector<2x1x33xf32>
      tpu.vector_store %arg8[%c0_11, %c0_12, %c0_13], %18 {strides = array<i32>} : memref<2x1x33xf32, #tpu.memory_space<vmem>>, vector<2x1x33xf32>,
      %cst_14 = arith.constant 0xFF800000 : f32
      %20 = vector.broadcast %cst_14 : f32 to vector<2x1x1xf32>
      %c0_15 = arith.constant 0 : index
      %c0_16 = arith.constant 0 : index
      %c0_17 = arith.constant 0 : index
      %21 = vector.load %arg9[%c0_15, %c0_16, %c0_17] : memref<2x1x1xf32, #tpu.memory_space<vmem>>, vector<2x1x1xf32>
      tpu.vector_store %arg9[%c0_15, %c0_16, %c0_17], %20 {strides = array<i32>} : memref<2x1x1xf32, #tpu.memory_space<vmem>>, vector<2x1x1xf32>,
    } else {
    }
    %c1_i32 = arith.constant 1 : i32
    %7 = arith.cmpi slt, %arg1, %c1_i32 : i32
    %8 = arith.extui %7 : i1 to i32
    %c0_i32_2 = arith.constant 0 : i32
    %9 = arith.cmpi ne, %8, %c0_i32_2 : i32
    scf.if %9 {
      %c0_7 = arith.constant 0 : index
      %c0_8 = arith.constant 0 : index
      %c0_9 = arith.constant 0 : index
      %16 = vector.load %arg3[%c0_7, %c0_8, %c0_9] : memref<2x8x32xf32, #tpu.memory_space<vmem>>, vector<2x8x32xf32>
      %c0_10 = arith.constant 0 : index
      %c0_11 = arith.constant 0 : index
      %c0_12 = arith.constant 0 : index
      %17 = vector.load %arg4[%c0_10, %c0_11, %c0_12] : memref<2x8x32xf32, #tpu.memory_space<vmem>>, vector<2x8x32xf32>
      "tpu.trace_start"() <{level = 10 : i32, message = "gnd,dm->gnm"}> : () -> ()
      %cst = arith.constant dense<0.000000e+00> : vector<2x8x128xf32>
      %18 = tpu.matmul %16, %0, %cst {dimension_numbers = #tpu.dot_dimension_numbers<[2], [0], [0, 1], [1], [0, 0, 0, 1, 1, 1], [], []>} : vector<2x8x32xf32>, vector<32x128xf32>, vector<2x8x128xf32> -> vector<2x8x128xf32>
      %cst_13 = arith.constant -1.000000e+30 : f32
      "tpu.trace_stop"() : () -> ()
      %19 = vector.shape_cast %3 : vector<1x1x128xi1> to vector<1x1x128xi1>
      %20 = vector.broadcast %19 : vector<1x1x128xi1> to vector<2x8x128xi1>
      %21 = vector.broadcast %cst_13 : f32 to vector<2x8x128xf32>
      %22 = arith.select %20, %18, %21 : vector<2x8x128xi1>, vector<2x8x128xf32>
      %23 = arith.mulf %16, %16 : vector<2x8x32xf32>
      %cst_14 = arith.constant dense<0.000000e+00> : vector<2x8xf32>
      %24 = vector.multi_reduction <add>, %23, %cst_14 [2] : vector<2x8x32xf32> to vector<2x8xf32>
      %25 = vector.shape_cast %24 : vector<2x8xf32> to vector<2x8x1xf32>
      %cst_15 = arith.constant 0.0883883461 : f32
      %26 = vector.broadcast %cst_15 : f32 to vector<2x8x1xf32>
      %27 = arith.mulf %26, %25 : vector<2x8x1xf32>
      %cst_16 = arith.constant dense<0xFF800000> : vector<2x8xf32>
      %28 = vector.multi_reduction <maximumf>, %22, %cst_16 [2] : vector<2x8x128xf32> to vector<2x8xf32>
      %29 = vector.shape_cast %28 : vector<2x8xf32> to vector<2x8x1xf32>
      %cst_17 = arith.constant dense<0xFF800000> : vector<2x1xf32>
      %30 = vector.multi_reduction <maximumf>, %29, %cst_17 [1] : vector<2x8x1xf32> to vector<2x1xf32>
      %31 = vector.shape_cast %30 : vector<2x1xf32> to vector<2x1x1xf32>
      %c0_18 = arith.constant 0 : index
      %c0_19 = arith.constant 0 : index
      %c0_20 = arith.constant 0 : index
      %32 = vector.load %arg9[%c0_18, %c0_19, %c0_20] : memref<2x1x1xf32, #tpu.memory_space<vmem>>, vector<2x1x1xf32>
      %33 = arith.maximumf %32, %31 : vector<2x1x1xf32>
      %c0_21 = arith.constant 0 : index
      %c0_22 = arith.constant 0 : index
      %c0_23 = arith.constant 0 : index
      %34 = vector.load %arg9[%c0_21, %c0_22, %c0_23] : memref<2x1x1xf32, #tpu.memory_space<vmem>>, vector<2x1x1xf32>
      tpu.vector_store %arg9[%c0_21, %c0_22, %c0_23], %33 {strides = array<i32>} : memref<2x1x1xf32, #tpu.memory_space<vmem>>, vector<2x1x1xf32>,
      %35 = arith.subf %32, %33 : vector<2x1x1xf32>
      %36 = math.exp %35 : vector<2x1x1xf32>
      %37 = vector.broadcast %33 : vector<2x1x1xf32> to vector<2x8x1xf32>
      %38 = arith.addf %27, %37 : vector<2x8x1xf32>
      %39 = vector.broadcast %38 : vector<2x8x1xf32> to vector<2x8x128xf32>
      %40 = arith.subf %22, %39 : vector<2x8x128xf32>
      %41 = math.exp %40 : vector<2x8x128xf32>
      %cst_24 = arith.constant 1.000000e+00 : f32
      %42 = vector.broadcast %cst_24 : f32 to vector<2x8x1xf32>
      %43 = tpu.concatenate %17, %42 in 2 : vector<2x8x32xf32>, vector<2x8x1xf32> -> vector<2x8x33xf32>
      "tpu.trace_start"() <{level = 10 : i32, message = "gnm,gnd->gmd"}> : () -> ()
      %cst_25 = arith.constant dense<0.000000e+00> : vector<2x128x33xf32>
      %44 = tpu.matmul %41, %43, %cst_25 {dimension_numbers = #tpu.dot_dimension_numbers<[1], [1], [2], [2], [0, 0, 0, 2, 1, 2], [0], [0]>} : vector<2x8x128xf32>, vector<2x8x33xf32>, vector<2x128x33xf32> -> vector<2x128x33xf32>
      "tpu.trace_stop"() : () -> ()
      %c0_26 = arith.constant 0 : index
      %c0_27 = arith.constant 0 : index
      %c0_28 = arith.constant 0 : index
      %45 = vector.load %arg7[%c0_26, %c0_27, %c0_28] : memref<2x128x33xf32, #tpu.memory_space<vmem>>, vector<2x128x33xf32>
      %46 = vector.broadcast %36 : vector<2x1x1xf32> to vector<2x128x33xf32>
      %47 = arith.mulf %45, %46 : vector<2x128x33xf32>
      %48 = arith.addf %47, %44 : vector<2x128x33xf32>
      %c0_29 = arith.constant 0 : index
      %c0_30 = arith.constant 0 : index
      %c0_31 = arith.constant 0 : index
      %49 = vector.load %arg7[%c0_29, %c0_30, %c0_31] : memref<2x128x33xf32, #tpu.memory_space<vmem>>, vector<2x128x33xf32>
      tpu.vector_store %arg7[%c0_29, %c0_30, %c0_31], %48 {strides = array<i32>} : memref<2x128x33xf32, #tpu.memory_space<vmem>>, vector<2x128x33xf32>,
      %c0_32 = arith.constant 0 : index
      %c0_33 = arith.constant 0 : index
      %c0_34 = arith.constant 0 : index
      %50 = vector.load %arg8[%c0_32, %c0_33, %c0_34] : memref<2x1x33xf32, #tpu.memory_space<vmem>>, vector<2x1x33xf32>
      %cst_35 = arith.constant dense<0.000000e+00> : vector<2x33xf32>
      %51 = vector.multi_reduction <add>, %43, %cst_35 [1] : vector<2x8x33xf32> to vector<2x33xf32>
      %52 = vector.shape_cast %51 : vector<2x33xf32> to vector<2x1x33xf32>
      %53 = arith.addf %50, %52 : vector<2x1x33xf32>
      %c0_36 = arith.constant 0 : index
      %c0_37 = arith.constant 0 : index
      %c0_38 = arith.constant 0 : index
      %54 = vector.load %arg8[%c0_36, %c0_37, %c0_38] : memref<2x1x33xf32, #tpu.memory_space<vmem>>, vector<2x1x33xf32>
      tpu.vector_store %arg8[%c0_36, %c0_37, %c0_38], %53 {strides = array<i32>} : memref<2x1x33xf32, #tpu.memory_space<vmem>>, vector<2x1x33xf32>,
    } else {
    }
    %c1_i32_3 = arith.constant 1 : i32
    %10 = arith.cmpi eq, %arg1, %c1_i32_3 : i32
    %11 = arith.extui %10 : i1 to i32
    %c0_i32_4 = arith.constant 0 : i32
    %12 = arith.cmpi ne, %11, %c0_i32_4 : i32
    scf.if %12 {
      %16 = tpu.iota {dimensions = array<i32: 1>} : vector<1x128x1xi32>
      %c110_i32_7 = arith.constant 110 : i32
      %17 = vector.broadcast %c110_i32_7 : i32 to vector<1x128x1xi32>
      %18 = arith.cmpi slt, %16, %17 : vector<1x128x1xi32>
      %cst = arith.constant 9.53462586E-6 : f32
      %cst_8 = arith.constant 0.000000e+00 : f32
      %19 = vector.broadcast %cst : f32 to vector<1x128x1xf32>
      %20 = vector.broadcast %cst_8 : f32 to vector<1x128x1xf32>
      %21 = arith.select %18, %19, %20 : vector<1x128x1xi1>, vector<1x128x1xf32>
      %c0_9 = arith.constant 0 : index
      %c0_10 = arith.constant 0 : index
      %c0_11 = arith.constant 0 : index
      %22 = vector.load %arg7[%c0_9, %c0_10, %c0_11] : memref<2x128x33xf32, #tpu.memory_space<vmem>>, vector<2x128x33xf32>
      %cst_12 = arith.constant 0.0953462571 : f32
      %23 = vector.broadcast %cst_12 : f32 to vector<2x128x33xf32>
      %24 = arith.mulf %23, %22 : vector<2x128x33xf32>
      %c0_13 = arith.constant 0 : index
      %c0_14 = arith.constant 0 : index
      %c0_15 = arith.constant 0 : index
      %25 = vector.load %arg8[%c0_13, %c0_14, %c0_15] : memref<2x1x33xf32, #tpu.memory_space<vmem>>, vector<2x1x33xf32>
      %26 = vector.broadcast %21 : vector<1x128x1xf32> to vector<2x128x33xf32>
      %27 = vector.broadcast %25 : vector<2x1x33xf32> to vector<2x128x33xf32>
      %28 = arith.mulf %26, %27 : vector<2x128x33xf32>
      %29 = arith.addf %24, %28 : vector<2x128x33xf32>
      %c0_16 = arith.constant 0 : index
      %c0_17 = arith.constant 0 : index
      %c0_18 = arith.constant 0 : index
      %30 = vector.load %arg7[%c0_16, %c0_17, %c0_18] : memref<2x128x33xf32, #tpu.memory_space<vmem>>, vector<2x128x33xf32>
      tpu.vector_store %arg7[%c0_16, %c0_17, %c0_18], %29 {strides = array<i32>} : memref<2x128x33xf32, #tpu.memory_space<vmem>>, vector<2x128x33xf32>,
    } else {
    }
    %c1_i32_5 = arith.constant 1 : i32
    %13 = arith.cmpi sge, %arg1, %c1_i32_5 : i32
    %14 = arith.extui %13 : i1 to i32
    %c0_i32_6 = arith.constant 0 : i32
    %15 = arith.cmpi ne, %14, %c0_i32_6 : i32
    scf.if %15 {
      %c0_7 = arith.constant 0 : index
      %c0_8 = arith.constant 0 : index
      %c0_9 = arith.constant 0 : index
      %16 = vector.load %arg2[%c0_7, %c0_8, %c0_9] : memref<2x8x32xf32, #tpu.memory_space<vmem>>, vector<2x8x32xf32>
      "tpu.trace_start"() <{level = 10 : i32, message = "gnd,dm->gnm"}> : () -> ()
      %cst = arith.constant dense<0.000000e+00> : vector<2x8x128xf32>
      %17 = tpu.matmul %16, %0, %cst {dimension_numbers = #tpu.dot_dimension_numbers<[2], [0], [0, 1], [1], [0, 0, 0, 1, 1, 1], [], []>} : vector<2x8x32xf32>, vector<32x128xf32>, vector<2x8x128xf32> -> vector<2x8x128xf32>
      %cst_10 = arith.constant -1.000000e+30 : f32
      "tpu.trace_stop"() : () -> ()
      %18 = vector.shape_cast %3 : vector<1x1x128xi1> to vector<1x1x128xi1>
      %19 = vector.broadcast %18 : vector<1x1x128xi1> to vector<2x8x128xi1>
      %20 = vector.broadcast %cst_10 : f32 to vector<2x8x128xf32>
      %21 = arith.select %19, %17, %20 : vector<2x8x128xi1>, vector<2x8x128xf32>
      %22 = arith.mulf %16, %16 : vector<2x8x32xf32>
      %cst_11 = arith.constant dense<0.000000e+00> : vector<2x8xf32>
      %23 = vector.multi_reduction <add>, %22, %cst_11 [2] : vector<2x8x32xf32> to vector<2x8xf32>
      %24 = vector.shape_cast %23 : vector<2x8xf32> to vector<2x8x1xf32>
      %cst_12 = arith.constant 0.0883883461 : f32
      %25 = vector.broadcast %cst_12 : f32 to vector<2x8x1xf32>
      %26 = arith.mulf %25, %24 : vector<2x8x1xf32>
      %cst_13 = arith.constant dense<0xFF800000> : vector<2x8xf32>
      %27 = vector.multi_reduction <maximumf>, %21, %cst_13 [2] : vector<2x8x128xf32> to vector<2x8xf32>
      %28 = vector.shape_cast %27 : vector<2x8xf32> to vector<2x8x1xf32>
      %cst_14 = arith.constant 9.53462586E-6 : f32
      %cst_15 = arith.constant 0.000000e+00 : f32
      %29 = vector.broadcast %cst_14 : f32 to vector<1x1x128xf32>
      %30 = vector.broadcast %cst_15 : f32 to vector<1x1x128xf32>
      %31 = arith.select %3, %29, %30 : vector<1x1x128xi1>, vector<1x1x128xf32>
      %32 = arith.addf %26, %28 : vector<2x8x1xf32>
      %cst_16 = arith.constant -2.35024023 : f32
      %33 = vector.broadcast %cst_16 : f32 to vector<2x8x1xf32>
      %34 = arith.subf %32, %33 : vector<2x8x1xf32>
      %35 = vector.broadcast %34 : vector<2x8x1xf32> to vector<2x8x128xf32>
      %36 = arith.subf %21, %35 : vector<2x8x128xf32>
      %37 = math.exp %36 : vector<2x8x128xf32>
      %38 = vector.broadcast %31 : vector<1x1x128xf32> to vector<2x8x128xf32>
      %39 = arith.addf %37, %38 : vector<2x8x128xf32>
      %c0_17 = arith.constant 0 : index
      %c0_18 = arith.constant 0 : index
      %c0_19 = arith.constant 0 : index
      %40 = vector.load %arg7[%c0_17, %c0_18, %c0_19] : memref<2x128x33xf32, #tpu.memory_space<vmem>>, vector<2x128x33xf32>
      "tpu.trace_start"() <{level = 10 : i32, message = "gnm,gmd->gnd"}> : () -> ()
      %cst_20 = arith.constant dense<0.000000e+00> : vector<2x8x33xf32>
      %41 = tpu.matmul %39, %40, %cst_20 {dimension_numbers = #tpu.dot_dimension_numbers<[2], [1], [1], [2], [0, 0, 0, 1, 1, 2], [0], [0]>} : vector<2x8x128xf32>, vector<2x128x33xf32>, vector<2x8x33xf32> -> vector<2x8x33xf32>
      "tpu.trace_stop"() : () -> ()
      %42 = vector.extract_strided_slice %41 {offsets = [0, 0, 0], sizes = [2, 8, 32], strides = [1, 1, 1]} : vector<2x8x33xf32> to vector<2x8x32xf32>
      %43 = vector.extract_strided_slice %41 {offsets = [0, 0, 32], sizes = [2, 8, 1], strides = [1, 1, 1]} : vector<2x8x33xf32> to vector<2x8x1xf32>
      %cst_21 = arith.constant 0.000000e+00 : f32
      %44 = vector.broadcast %cst_21 : f32 to vector<2x8x1xf32>
      %45 = arith.cmpf oeq, %43, %44 : vector<2x8x1xf32>
      %cst_22 = arith.constant 9.99999974E-6 : f32
      %46 = vector.broadcast %cst_22 : f32 to vector<2x8x1xf32>
      %47 = arith.select %45, %46, %43 : vector<2x8x1xi1>, vector<2x8x1xf32>
      %cst_23 = arith.constant 1.000000e+00 : f32
      %48 = vector.broadcast %cst_23 : f32 to vector<2x8x1xf32>
      %49 = arith.divf %48, %47 : vector<2x8x1xf32>
      %50 = vector.broadcast %49 : vector<2x8x1xf32> to vector<2x8x32xf32>
      %51 = arith.mulf %42, %50 : vector<2x8x32xf32>
      %c0_24 = arith.constant 0 : index
      %c0_25 = arith.constant 0 : index
      %c0_26 = arith.constant 0 : index
      %52 = vector.load %arg6[%c0_24, %c0_25, %c0_26] : memref<2x8x32xf32, #tpu.memory_space<vmem>>, vector<2x8x32xf32>
      tpu.vector_store %arg6[%c0_24, %c0_25, %c0_26], %51 {strides = array<i32>} : memref<2x8x32xf32, #tpu.memory_space<vmem>>, vector<2x8x32xf32>,
    } else {
    }
    return
  }
  func.func @transform_0(%arg0: i32, %arg1: i32) -> (i32, i32, i32) {
    %c1_i32 = arith.constant 1 : i32
    %0 = arith.subi %arg1, %c1_i32 : i32
    %c0_i32 = arith.constant 0 : i32
    %1 = arith.maxsi %0, %c0_i32 : i32
    %c0_i32_0 = arith.constant 0 : i32
    %c0_i32_1 = arith.constant 0 : i32
    return %arg0, %1, %c0_i32_0 : i32, i32, i32
  }
  func.func @transform_1(%arg0: i32, %arg1: i32) -> (i32, i32, i32) {
    %c0_i32 = arith.constant 0 : i32
    %0 = arith.minsi %arg1, %c0_i32 : i32
    %c0_i32_0 = arith.constant 0 : i32
    %c0_i32_1 = arith.constant 0 : i32
    return %arg0, %0, %c0_i32_0 : i32, i32, i32
  }
  func.func @transform_2(%arg0: i32, %arg1: i32) -> (i32, i32, i32) {
    %c0_i32 = arith.constant 0 : i32
    %0 = arith.minsi %arg1, %c0_i32 : i32
    %c0_i32_0 = arith.constant 0 : i32
    %c0_i32_1 = arith.constant 0 : i32
    return %arg0, %0, %c0_i32_0 : i32, i32, i32
  }
  func.func @transform_3(%arg0: i32, %arg1: i32) -> (i32, i32) {
    %c0_i32 = arith.constant 0 : i32
    %c0_i32_0 = arith.constant 0 : i32
    %c0_i32_1 = arith.constant 0 : i32
    return %c0_i32, %c0_i32_0 : i32, i32
  }
  func.func @transform_4(%arg0: i32, %arg1: i32) -> (i32, i32, i32) {
    %c1_i32 = arith.constant 1 : i32
    %0 = arith.subi %arg1, %c1_i32 : i32
    %c0_i32 = arith.constant 0 : i32
    %1 = arith.maxsi %0, %c0_i32 : i32
    %c0_i32_0 = arith.constant 0 : i32
    %c0_i32_1 = arith.constant 0 : i32
    return %arg0, %1, %c0_i32_0 : i32, i32, i32
  }
}

</mosaic_0001>

<llo_original>
// kernel: tpu_custom_call.1
$region0: #{tpu_custom_call.1}
  #allocation0 [shape = 'u32[]', space=smem, size = 0x4, offset = 0x4, fixed_abs, tag = 'smem constant byte address 0x4 - core index']
  #allocation1 [shape = 'u32[144,128]{1,0:T(1,128)}', space=vmem, size = 0x12000, scoped, tag = 'internal scratch']
  #allocation2 [shape = 'f32[2,128,33]{2,1,0:T(8,128)}', space=vmem, size = 0x20000, scoped, tag = 'scratch operand']
  #allocation3 [shape = 'f32[2,1,33]{2,1,0:T(1,128)}', space=vmem, size = 0x400, scoped, tag = 'scratch operand']
  #allocation4 [shape = 'f32[2,1,1]{2,1,0:T(1,128)}', space=vmem, size = 0x400, scoped, tag = 'scratch operand']
  %s0 = inlined_call_operand.hbm [shape: f32[4,8,32], index: 0, kind: input, shape index: {}]
  %s1 = inlined_call_operand.hbm [shape: f32[4,8,32], index: 1, kind: input, shape index: {}]
  %s2 = inlined_call_operand.hbm [shape: f32[4,8,32], index: 2, kind: input, shape index: {}]
  %s3 = inlined_call_operand.hbm [shape: f32[32,128], index: 3, kind: input, shape index: {}]
  %s4 = inlined_call_operand.hbm [shape: f32[4,8,32], index: 4, kind: output, shape index: {}]
  %s5 = sld [smem:[#allocation0]]
  $region81: #{tpu_custom_call.1} parent=0
    _
  %s7 = ssub.s32 1, %s5
  %s8 = scalar_select 0, %s7, %s5
  $region1: #{tpu_custom_call.1} parent=0
    #allocation5 [shape = 'u8[16384]{0}', space=vmem, size = 0x4000, scoped, tag = 'input window, operand 0']
    #allocation6 [shape = 's32[2]{0}', space=sflag, size = 0x8, scoped, tag = 'scoped memory for tpu_custom_call.1']
    #allocation7 [shape = 's32[2]{0}', space=sflag, size = 0x8, scoped, tag = 'scoped memory for tpu_custom_call.1']
    #allocation8 [shape = 'u8[16384]{0}', space=vmem, size = 0x4000, scoped, tag = 'input window, operand 1']
    #allocation9 [shape = 's32[2]{0}', space=sflag, size = 0x8, scoped, tag = 'scoped memory for tpu_custom_call.1']
    #allocation10 [shape = 'u8[16384]{0}', space=vmem, size = 0x4000, scoped, tag = 'input window, operand 2']
    #allocation11 [shape = 'u8[16384]{0}', space=vmem, size = 0x4000, scoped, tag = 'input window, operand 3, single buffered']
    #allocation12 [shape = 's32[1]{0}', space=sflag, size = 0x4, scoped, tag = 'scoped memory for tpu_custom_call.1']
    #allocation13 [shape = 'u8[16384]{0}', space=vmem, size = 0x4000, scoped, tag = 'output window, operand 0']
    %9 = vsyncpa [#allocation6], 0
    %s10 = scalar_lea.sflag [#allocation6], 1
    %11 = vsyncpa %s10, 0
    %12 = vsyncpa [#allocation9], 0
    %s13 = scalar_lea.sflag [#allocation9], 1
    %14 = vsyncpa %s13, 0
    %15 = vsyncpa [#allocation12], 0
    %16 = vsyncpa [#allocation7], 0
    %s17 = scalar_lea.sflag [#allocation7], 1
    %18 = vsyncpa %s17, 0
    loop: start=0, step=1, limit=6
    $region2: #{tpu_custom_call.1} parent=1 // loop_pre_header
      _
    $region3: #{tpu_custom_call.1} parent=1 // loop_header
      %s20 = sphi 0, %s24
      %p21 = scmp.ge.s32.totalorder %s20, 6
      %s27 = sphi 0, %s39
      %s28 = sphi 0, %s35
      %s29 = sphi 0, %s27
      %s30 = sphi 0, %s28
      %s31 = sphi 0, %s29
      %s32 = sphi 0, %s30
      %s50 = sphi 0, %s52
      %s53 = sphi 0, %s50
      %s54 = sphi 0, %s53
      %s70 = sphi 0, %s54
      %s82 = sphi 0, %s84
      %s85 = sphi 0, %s82
      %s86 = sphi 0, %s85
      %s102 = sphi 0, %s86
      %s114 = sphi 0, %s116
      %s117 = sphi 0, %s114
      %s118 = sphi 0, %s117
      %s134 = sphi 0, %s118
      %s138 = sphi 0, %s138
      %s140 = sphi 0, %s138
      %s141 = sphi 0, %s140
      %s155 = sphi 0, %s141
      %s169 = sphi 0, %s171
      %s172 = sphi 0, %s169
      %s173 = sphi 0, %s172
      %s189 = sphi 0, %s173
    $region4: #{tpu_custom_call.1} parent=1 // loop_header_branch
      %23 = sbr.rel (%p21) target = $region8
    $region5: #{tpu_custom_call.1} parent=1 // loop_body
      %s25 = ssub.s32 %s20, 1
      %s26 = ssub.s32 %s20, 2
      %s33 = sadd.s32 1, %s28
      %p34 = scmp.ge.s32.totalorder %s33, 2
      %s35 = scalar_select %p34, 0, %s33
      %s36 = sadd.s32 1, %s27
      %s37 = scalar_select %p34, %s36, %s27
      %p38 = scmp.ge.s32.totalorder %s37, 2
      %s39 = scalar_select %p38, 0, %s37
      %s40 = ssub.s32 %s28, 1
      %p41 = scmp.gt.s32.totalorder %s40, 0
      %s42 = scalar_select %p41, %s40, 0
      %s43 = ssub.s32 %s35, 1
      %p44 = scmp.gt.s32.totalorder %s43, 0
      %s45 = scalar_select %p44, %s43, 0
      %s46 = ssub.s32 %s27, %s39
      %s47 = ssub.s32 %s42, %s45
      %s48 = sor.u32 %s46, %s47
      %p49 = scmp.eq.s32.totalorder %s48, 0
      %s51 = sadd.s32 %s50, 1
      %s52 = scalar_select %p49, %s50, %s51
      %p55 = pneg %p49
      %p56 = scmp.eq.s32.totalorder %s20, 3
      %p57 = por %p55, %p56
      %p58 = scmp.ne.s32.totalorder %s50, %s53
      %p59 = scmp.eq.s32.totalorder %s20, 0
      %p60 = por %p58, %p59
      %p61 = scmp.ne.s32.totalorder %s50, %s53
      %p62 = scmp.eq.s32.totalorder %s25, 3
      %p63 = por %p61, %p62
      %p64 = scmp.ne.s32.totalorder %s53, %s54
      %p65 = scmp.eq.s32.totalorder %s25, 0
      %p66 = por %p64, %p65
      %p67 = scmp.ne.s32.totalorder %s53, %s54
      %p68 = scmp.eq.s32.totalorder %s26, 3
      %p69 = por %p67, %p68
      %p71 = scmp.ne.s32.totalorder %s54, %s70
      %p72 = scmp.eq.s32.totalorder %s26, 0
      %p73 = por %p71, %p72
      %p74 = scmp.lt.s32.totalorder %s28, 0
      %s75 = scalar_select %p74, %s28, 0
      %p76 = scmp.lt.s32.totalorder %s35, 0
      %s77 = scalar_select %p76, %s35, 0
      %s78 = ssub.s32 %s27, %s39
      %s79 = ssub.s32 %s75, %s77
      %s80 = sor.u32 %s78, %s79
      %p81 = scmp.eq.s32.totalorder %s80, 0
      %s83 = sadd.s32 %s82, 1
      %s84 = scalar_select %p81, %s82, %s83
      %p87 = pneg %p81
      %p88 = scmp.eq.s32.totalorder %s20, 3
      %p89 = por %p87, %p88
      %p90 = scmp.ne.s32.totalorder %s82, %s85
      %p91 = scmp.eq.s32.totalorder %s20, 0
      %p92 = por %p90, %p91
      %p93 = scmp.ne.s32.totalorder %s82, %s85
      %p94 = scmp.eq.s32.totalorder %s25, 3
      %p95 = por %p93, %p94
      %p96 = scmp.ne.s32.totalorder %s85, %s86
      %p97 = scmp.eq.s32.totalorder %s25, 0
      %p98 = por %p96, %p97
      %p99 = scmp.ne.s32.totalorder %s85, %s86
      %p100 = scmp.eq.s32.totalorder %s26, 3
      %p101 = por %p99, %p100
      %p103 = scmp.ne.s32.totalorder %s86, %s102
      %p104 = scmp.eq.s32.totalorder %s26, 0
      %p105 = por %p103, %p104
      %p106 = scmp.lt.s32.totalorder %s28, 0
      %s107 = scalar_select %p106, %s28, 0
      %p108 = scmp.lt.s32.totalorder %s35, 0
      %s109 = scalar_select %p108, %s35, 0
      %s110 = ssub.s32 %s27, %s39
      %s111 = ssub.s32 %s107, %s109
      %s112 = sor.u32 %s110, %s111
      %p113 = scmp.eq.s32.totalorder %s112, 0
      %s115 = sadd.s32 %s114, 1
      %s116 = scalar_select %p113, %s114, %s115
      %p119 = pneg %p113
      %p120 = scmp.eq.s32.totalorder %s20, 3
      %p121 = por %p119, %p120
      %p122 = scmp.ne.s32.totalorder %s114, %s117
      %p123 = scmp.eq.s32.totalorder %s20, 0
      %p124 = por %p122, %p123
      %p125 = scmp.ne.s32.totalorder %s114, %s117
      %p126 = scmp.eq.s32.totalorder %s25, 3
      %p127 = por %p125, %p126
      %p128 = scmp.ne.s32.totalorder %s117, %s118
      %p129 = scmp.eq.s32.totalorder %s25, 0
      %p130 = por %p128, %p129
      %p131 = scmp.ne.s32.totalorder %s117, %s118
      %p132 = scmp.eq.s32.totalorder %s26, 3
      %p133 = por %p131, %p132
      %p135 = scmp.ne.s32.totalorder %s118, %s134
      %p136 = scmp.eq.s32.totalorder %s26, 0
      %p137 = por %p135, %p136
      %s139 = sadd.s32 %s138, 1
      %p142 = scmp.eq.s32.totalorder %s20, 3
      %p143 = scmp.ne.s32.totalorder %s138, %s140
      %p144 = scmp.eq.s32.totalorder %s20, 0
      %p145 = por %p143, %p144
      %p146 = scmp.ne.s32.totalorder %s138, %s140
      %p147 = scmp.eq.s32.totalorder %s25, 3
      %p148 = por %p146, %p147
      %p149 = scmp.ne.s32.totalorder %s140, %s141
      %p150 = scmp.eq.s32.totalorder %s25, 0
      %p151 = por %p149, %p150
      %p152 = scmp.ne.s32.totalorder %s140, %s141
      %p153 = scmp.eq.s32.totalorder %s26, 3
      %p154 = por %p152, %p153
      %p156 = scmp.ne.s32.totalorder %s141, %s155
      %p157 = scmp.eq.s32.totalorder %s26, 0
      %p158 = por %p156, %p157
      %s159 = ssub.s32 %s28, 1
      %p160 = scmp.gt.s32.totalorder %s159, 0
      %s161 = scalar_select %p160, %s159, 0
      %s162 = ssub.s32 %s35, 1
      %p163 = scmp.gt.s32.totalorder %s162, 0
      %s164 = scalar_select %p163, %s162, 0
      %s165 = ssub.s32 %s27, %s39
      %s166 = ssub.s32 %s161, %s164
      %s167 = sor.u32 %s165, %s166
      %p168 = scmp.eq.s32.totalorder %s167, 0
      %s170 = sadd.s32 %s169, 1
      %s171 = scalar_select %p168, %s169, %s170
      %p174 = pneg %p168
      %p175 = scmp.eq.s32.totalorder %s20, 3
      %p176 = por %p174, %p175
      %p177 = scmp.ne.s32.totalorder %s169, %s172
      %p178 = scmp.eq.s32.totalorder %s20, 0
      %p179 = por %p177, %p178
      %p180 = scmp.ne.s32.totalorder %s169, %s172
      %p181 = scmp.eq.s32.totalorder %s25, 3
      %p182 = por %p180, %p181
      %p183 = scmp.ne.s32.totalorder %s172, %s173
      %p184 = scmp.eq.s32.totalorder %s25, 0
      %p185 = por %p183, %p184
      %p186 = scmp.ne.s32.totalorder %s172, %s173
      %p187 = scmp.eq.s32.totalorder %s26, 3
      %p188 = por %p186, %p187
      %p190 = scmp.ne.s32.totalorder %s173, %s189
      %p191 = scmp.eq.s32.totalorder %s26, 0
      %p192 = por %p190, %p191
      %p193 = scmp.le.s32.totalorder 1, %s20
      %p194 = scmp.lt.s32.totalorder %s20, 5
      %p195 = pnand %p193, %p194
      %p196 = pneg %p195
      // Predicated region
      $region9: #{tpu_custom_call.1} parent=5 // pred_check
        _
      $region10: #{tpu_custom_call.1} parent=5 // pred_check_branch
        %198 = sbr.rel (%p195) target = $region12
      $region11: #{tpu_custom_call.1} parent=5 // pred_region
        %s199 = ssub.s32 %s20, 1
        // Predicated region
        $region13: #{tpu_custom_call.1} parent=11 // pred_check
          %p200 = pneg %p151
        $region14: #{tpu_custom_call.1} parent=11 // pred_check_branch
          %202 = sbr.rel (%p200) target = $region16
        $region15: #{tpu_custom_call.1} parent=11 // pred_region
          %s204 = ssub.s32 512, 512
          %205 = vsyncadd [#allocation12], %s204
          %s206 = sshll.u32 [#allocation11], 4
          %s207 = int_to_ptr.vmem [resolvable:$true] %s206
          %212 = dma.hbm_to_vmem [thread:$0]  %s3, 512, %s207, [#allocation12], 128, 128, 8
        $region16: #{tpu_custom_call.1} parent=11 // pred_fallthru
          _
      $region12: #{tpu_custom_call.1} parent=5 // pred_fallthru
        _
      %p213 = scmp.lt.s32.totalorder %s20, 4
      // Predicated region
      $region17: #{tpu_custom_call.1} parent=5 // pred_check
        %p214 = pneg %p213
      $region18: #{tpu_custom_call.1} parent=5 // pred_check_branch
        %216 = sbr.rel (%p214) target = $region20
      $region19: #{tpu_custom_call.1} parent=5 // pred_region
        // Predicated region
        $region21: #{tpu_custom_call.1} parent=19 // pred_check
          %p217 = pneg %p60
        $region22: #{tpu_custom_call.1} parent=19 // pred_check_branch
          %219 = sbr.rel (%p217) target = $region24
        $region23: #{tpu_custom_call.1} parent=19 // pred_region
          %s220 = sand.u32 %s50, 1
          %s221 = scalar_lea.sflag [#allocation6], %s220
          %s222 = sand.u32 %s50, 1
          %s223 = smul.addr %s222, 16
          %s224 = scalar_lea.vmem [#allocation5], %s223
          %s225 = ssub.s32 %s28, 1
          %p226 = scmp.gt.s32.totalorder %s225, 0
          %s227 = scalar_select %p226, %s225, 0
          %s228 = smul.u32 2, %s27
          %s230 = ssub.s32 256, 256
          %231 = vsyncadd %s221, %s230
          %s232 = sadd.s32 %s227, %s228
          %s233 = smul.addr %s232, 128
          %s234 = scalar_lea.hbm %s0, %s233
          %s235 = sshll.u32 %s224, 4
          %s236 = int_to_ptr.vmem [resolvable:$true] %s235
          %241 = dma.hbm_to_vmem [thread:$0]  %s234, 256, %s236, %s221, 128, 128, 8
        $region24: #{tpu_custom_call.1} parent=19 // pred_fallthru
          _
        // Predicated region
        $region25: #{tpu_custom_call.1} parent=19 // pred_check
          %p242 = pneg %p92
        $region26: #{tpu_custom_call.1} parent=19 // pred_check_branch
          %244 = sbr.rel (%p242) target = $region28
        $region27: #{tpu_custom_call.1} parent=19 // pred_region
          %s245 = sand.u32 %s20, 1
          %s246 = scalar_lea.sflag [#allocation9], %s245
          %s247 = sand.u32 %s82, 1
          %s248 = smul.addr %s247, 16
          %s249 = scalar_lea.vmem [#allocation8], %s248
          %p250 = scmp.lt.s32.totalorder %s28, 0
          %s251 = scalar_select %p250, %s28, 0
          %s252 = smul.u32 2, %s27
          %s254 = ssub.s32 256, 256
          %255 = vsyncadd %s246, %s254
          %s256 = sadd.s32 %s251, %s252
          %s257 = smul.addr %s256, 128
          %s258 = scalar_lea.hbm %s1, %s257
          %s259 = sshll.u32 %s249, 4
          %s260 = int_to_ptr.vmem [resolvable:$true] %s259
          %265 = dma.hbm_to_vmem [thread:$0]  %s258, 256, %s260, %s246, 128, 128, 8
        $region28: #{tpu_custom_call.1} parent=19 // pred_fallthru
          _
        // Predicated region
        $region29: #{tpu_custom_call.1} parent=19 // pred_check
          %p266 = pneg %p124
        $region30: #{tpu_custom_call.1} parent=19 // pred_check_branch
          %268 = sbr.rel (%p266) target = $region32
        $region31: #{tpu_custom_call.1} parent=19 // pred_region
          %s269 = sand.u32 %s20, 1
          %s270 = scalar_lea.sflag [#allocation9], %s269
          %s271 = sand.u32 %s114, 1
          %s272 = smul.addr %s271, 16
          %s273 = scalar_lea.vmem [#allocation10], %s272
          %p274 = scmp.lt.s32.totalorder %s28, 0
          %s275 = scalar_select %p274, %s28, 0
          %s276 = smul.u32 2, %s27
          %s278 = ssub.s32 256, 256
          %279 = vsyncadd %s270, %s278
          %s280 = sadd.s32 %s275, %s276
          %s281 = smul.addr %s280, 128
          %s282 = scalar_lea.hbm %s2, %s281
          %s283 = sshll.u32 %s273, 4
          %s284 = int_to_ptr.vmem [resolvable:$true] %s283
          %289 = dma.hbm_to_vmem [thread:$0]  %s282, 256, %s284, %s270, 128, 128, 8
        $region32: #{tpu_custom_call.1} parent=19 // pred_fallthru
          _
      $region20: #{tpu_custom_call.1} parent=5 // pred_fallthru
        _
      %p290 = scmp.le.s32.totalorder 1, %s20
      %p291 = scmp.lt.s32.totalorder %s20, 5
      %p292 = pnand %p290, %p291
      %p293 = pneg %p292
      // Predicated region
      $region33: #{tpu_custom_call.1} parent=5 // pred_check
        _
      $region34: #{tpu_custom_call.1} parent=5 // pred_check_branch
        %295 = sbr.rel (%p292) target = $region36
      $region35: #{tpu_custom_call.1} parent=5 // pred_region
        %s296 = ssub.s32 %s20, 1
        %s297 = sand.u32 %s53, 1
        %s298 = scalar_lea.sflag [#allocation6], %s297
        %s299 = sand.u32 %s53, 1
        %s300 = smul.addr %s299, 16
        %s301 = scalar_lea.vmem [#allocation5], %s300
        // Predicated region
        $region37: #{tpu_custom_call.1} parent=35 // pred_check
          %p302 = pneg %p66
        $region38: #{tpu_custom_call.1} parent=35 // pred_check_branch
          %304 = sbr.rel (%p302) target = $region40
        $region39: #{tpu_custom_call.1} parent=35 // pred_region
          %305 = dma.done %s298, 256
        $region40: #{tpu_custom_call.1} parent=35 // pred_fallthru
          _
        %s306 = sand.u32 %s25, 1
        %s307 = scalar_lea.sflag [#allocation9], %s306
        %s308 = sand.u32 %s85, 1
        %s309 = smul.addr %s308, 16
        %s310 = scalar_lea.vmem [#allocation8], %s309
        // Predicated region
        $region41: #{tpu_custom_call.1} parent=35 // pred_check
          %p311 = pneg %p98
        $region42: #{tpu_custom_call.1} parent=35 // pred_check_branch
          %313 = sbr.rel (%p311) target = $region44
        $region43: #{tpu_custom_call.1} parent=35 // pred_region
          %314 = dma.done %s307, 256
        $region44: #{tpu_custom_call.1} parent=35 // pred_fallthru
          _
        %s315 = sand.u32 %s25, 1
        %s316 = scalar_lea.sflag [#allocation9], %s315
        %s317 = sand.u32 %s117, 1
        %s318 = smul.addr %s317, 16
        %s319 = scalar_lea.vmem [#allocation10], %s318
        // Predicated region
        $region45: #{tpu_custom_call.1} parent=35 // pred_check
          %p320 = pneg %p130
        $region46: #{tpu_custom_call.1} parent=35 // pred_check_branch
          %322 = sbr.rel (%p320) target = $region48
        $region47: #{tpu_custom_call.1} parent=35 // pred_region
          %323 = dma.done %s316, 256
        $region48: #{tpu_custom_call.1} parent=35 // pred_fallthru
          _
        // Predicated region
        $region49: #{tpu_custom_call.1} parent=35 // pred_check
          %p324 = pneg %p151
        $region50: #{tpu_custom_call.1} parent=35 // pred_check_branch
          %326 = sbr.rel (%p324) target = $region52
        $region51: #{tpu_custom_call.1} parent=35 // pred_region
          %327 = dma.done [#allocation12], 512
        $region52: #{tpu_custom_call.1} parent=35 // pred_fallthru
          _
        %s328 = sand.u32 %s53, 1
        %s329 = scalar_lea.sflag [#allocation6], %s328
        %s330 = sand.u32 %s53, 1
        %s331 = smul.addr %s330, 16
        %s332 = scalar_lea.vmem [#allocation5], %s331
        %p333 = pneg %p66
        %p334 = pneg %p63
        %s335 = sand.u32 %s25, 1
        %s336 = scalar_lea.sflag [#allocation9], %s335
        %s337 = sand.u32 %s85, 1
        %s338 = smul.addr %s337, 16
        %s339 = scalar_lea.vmem [#allocation8], %s338
        %p340 = pneg %p98
        %p341 = pneg %p95
        %s342 = sand.u32 %s25, 1
        %s343 = scalar_lea.sflag [#allocation9], %s342
        %s344 = sand.u32 %s117, 1
        %s345 = smul.addr %s344, 16
        %s346 = scalar_lea.vmem [#allocation10], %s345
        %p347 = pneg %p130
        %p348 = pneg %p127
        %p349 = pneg %p151
        %p350 = pneg %p148
        %p351 = pneg %p185
        %p352 = pneg %p182
        %s353 = sand.u32 %s172, 1
        %s354 = scalar_lea.sflag [#allocation7], %s353
        %s355 = sand.u32 %s172, 1
        %s356 = smul.addr %s355, 16
        %s357 = scalar_lea.vmem [#allocation13], %s356
        %s358 = ssub.s32 %s30, 1
        %p359 = scmp.gt.s32.totalorder %s358, 0
        %s360 = scalar_select %p359, %s358, 0
        %s361 = smul.u32 2, %s29
        %p362 = scmp.lt.s32.totalorder %s30, 0
        %s363 = scalar_select %p362, %s30, 0
        %s364 = smul.u32 2, %s29
        %p365 = scmp.lt.s32.totalorder %s30, 0
        %s366 = scalar_select %p365, %s30, 0
        %s367 = smul.u32 2, %s29
        %s368 = ssub.s32 %s30, 1
        %p369 = scmp.gt.s32.totalorder %s368, 0
        %s370 = scalar_select %p369, %s368, 0
        %s371 = smul.u32 2, %s29
        %v372 = vld [vmem:[#allocation11] sm:$0xff]
        %v373 = vld [vmem:[#allocation11 + $0x8] sm:$0xff]
        %v374 = vld [vmem:[#allocation11 + $0x10] sm:$0xff]
        %v375 = vld [vmem:[#allocation11 + $0x18] sm:$0xff]
        %v376 = vlaneseq
        %v377 = vand.u32 %v376, 127
        %vm378 = vcmp.lt.s32.totalorder %v377, 110
        %p379 = scmp.eq.s32.totalorder %s30, 0
        // Predicated region
        $region53: #{tpu_custom_call.1} parent=35 // pred_check
          %p380 = pneg %p379
        $region54: #{tpu_custom_call.1} parent=35 // pred_check_branch
          %382 = sbr.rel (%p380) target = $region56
        $region55: #{tpu_custom_call.1} parent=35 // pred_region
          %vm383 = vcmask 269312
          %384 = vst.msk [vmem:[#allocation2] sm:$0xff] %vm383, 0.0
          %385 = vst.msk [vmem:[#allocation2 + $0x8] sm:$0xff] %vm383, 0.0
          %386 = vst.msk [vmem:[#allocation2 + $0x10] sm:$0xff] %vm383, 0.0
          %387 = vst.msk [vmem:[#allocation2 + $0x18] sm:$0xff] %vm383, 0.0
          %388 = vst.msk [vmem:[#allocation2 + $0x20] sm:$0xff] %vm383, 0.0
          %389 = vst.msk [vmem:[#allocation2 + $0x28] sm:$0xff] %vm383, 0.0
          %390 = vst.msk [vmem:[#allocation2 + $0x30] sm:$0xff] %vm383, 0.0
          %391 = vst.msk [vmem:[#allocation2 + $0x38] sm:$0xff] %vm383, 0.0
          %392 = vst.msk [vmem:[#allocation2 + $0x40] sm:$0xff] %vm383, 0.0
          %393 = vst.msk [vmem:[#allocation2 + $0x48] sm:$0xff] %vm383, 0.0
          %394 = vst.msk [vmem:[#allocation2 + $0x50] sm:$0xff] %vm383, 0.0
          %395 = vst.msk [vmem:[#allocation2 + $0x58] sm:$0xff] %vm383, 0.0
          %396 = vst.msk [vmem:[#allocation2 + $0x60] sm:$0xff] %vm383, 0.0
          %397 = vst.msk [vmem:[#allocation2 + $0x68] sm:$0xff] %vm383, 0.0
          %398 = vst.msk [vmem:[#allocation2 + $0x70] sm:$0xff] %vm383, 0.0
          %399 = vst.msk [vmem:[#allocation2 + $0x78] sm:$0xff] %vm383, 0.0
          %400 = vst.msk [vmem:[#allocation2 + $0x80] sm:$0xff] %vm383, 0.0
          %401 = vst.msk [vmem:[#allocation2 + $0x88] sm:$0xff] %vm383, 0.0
          %402 = vst.msk [vmem:[#allocation2 + $0x90] sm:$0xff] %vm383, 0.0
          %403 = vst.msk [vmem:[#allocation2 + $0x98] sm:$0xff] %vm383, 0.0
          %404 = vst.msk [vmem:[#allocation2 + $0xa0] sm:$0xff] %vm383, 0.0
          %405 = vst.msk [vmem:[#allocation2 + $0xa8] sm:$0xff] %vm383, 0.0
          %406 = vst.msk [vmem:[#allocation2 + $0xb0] sm:$0xff] %vm383, 0.0
          %407 = vst.msk [vmem:[#allocation2 + $0xb8] sm:$0xff] %vm383, 0.0
          %408 = vst.msk [vmem:[#allocation2 + $0xc0] sm:$0xff] %vm383, 0.0
          %409 = vst.msk [vmem:[#allocation2 + $0xc8] sm:$0xff] %vm383, 0.0
          %410 = vst.msk [vmem:[#allocation2 + $0xd0] sm:$0xff] %vm383, 0.0
          %411 = vst.msk [vmem:[#allocation2 + $0xd8] sm:$0xff] %vm383, 0.0
          %412 = vst.msk [vmem:[#allocation2 + $0xe0] sm:$0xff] %vm383, 0.0
          %413 = vst.msk [vmem:[#allocation2 + $0xe8] sm:$0xff] %vm383, 0.0
          %414 = vst.msk [vmem:[#allocation2 + $0xf0] sm:$0xff] %vm383, 0.0
          %415 = vst.msk [vmem:[#allocation2 + $0xf8] sm:$0xff] %vm383, 0.0
          %vm416 = vcmask 262144
          %417 = vst.msk [vmem:[#allocation3] sm:$0x1] %vm416, 0.0
          %418 = vst.msk [vmem:[#allocation3 + $0x1] sm:$0x1] %vm416, 0.0
          %vm419 = vcmask 0
          %420 = vst.msk [vmem:[#allocation4] sm:$0x1] %vm419, -inf
          %421 = vst.msk [vmem:[#allocation4 + $0x1] sm:$0x1] %vm419, -inf
        $region56: #{tpu_custom_call.1} parent=35 // pred_fallthru
          _
        %p422 = scmp.lt.s32.totalorder %s30, 1
        // Predicated region
        $region57: #{tpu_custom_call.1} parent=35 // pred_check
          %p423 = pneg %p422
        $region58: #{tpu_custom_call.1} parent=35 // pred_check_branch
          %425 = sbr.rel (%p423) target = $region60
        $region59: #{tpu_custom_call.1} parent=35 // pred_region
          %v426 = vld [vmem:[%s310] sm:$0xff]
          %v427 = vld [vmem:[%s310 + $0x8] sm:$0xff]
          %v428 = vld [vmem:[%s319] sm:$0xff]
          %v429 = vld [vmem:[%s319 + $0x8] sm:$0xff]
          %vm430 = vcmask 261120
          %v432 = vsel %vm430, %v426, 0
          %v435 = vsel %vm430, %v427, 0
          %437 = vmatprep.subr.mxu0 0.0
          %438 = vmatpush1.msra.mxu0 0.0
          %439 = vmatprep.subr.mxu0 0.0
          %440 = vmatpush1.msra.mxu0 0.0
          %441 = vmatprep.subr.mxu0 0.0
          %442 = vmatpush1.msra.mxu0 0.0
          %443 = vmatprep.subr.mxu0 0.0
          %444 = vmatpush1.msra.mxu0 0.0
          %445 = vmatprep.subr.mxu0 0.0
          %446 = vmatpush1.msra.mxu0 0.0
          %447 = vmatprep.subr.mxu0 0.0
          %448 = vmatpush1.msra.mxu0 0.0
          %449 = vmatprep.subr.mxu0 0.0
          %450 = vmatpush1.msra.mxu0 0.0
          %451 = vmatprep.subr.mxu0 0.0
          %452 = vmatpush1.msra.mxu0 0.0
          %453 = vmatprep.subr.mxu0 0.0
          %454 = vmatpush1.msra.mxu0 0.0
          %455 = vmatprep.subr.mxu0 0.0
          %456 = vmatpush1.msra.mxu0 0.0
          %457 = vmatprep.subr.mxu0 0.0
          %458 = vmatpush1.msra.mxu0 0.0
          %459 = vmatprep.subr.mxu0 0.0
          %460 = vmatpush1.msra.mxu0 0.0
          %461 = vmatprep.subr.mxu0 0.0
          %462 = vmatpush1.msra.mxu0 %v375
          %463 = vmatprep.subr.mxu0 0.0
          %464 = vmatpush1.msra.mxu0 %v374
          %465 = vmatprep.subr.mxu0 0.0
          %466 = vmatpush1.msra.mxu0 %v373
          %467 = vmatprep.subr.mxu0 0.0
          %468 = vmatpush1.msra.mxu0 %v372
          %469 = vmatprep.subr.mxu0 0.0
          %470 = vmatpush2.msra.mxu0 0.0
          %471 = vmatprep.subr.mxu0 0.0
          %472 = vmatpush2.msra.mxu0 0.0
          %473 = vmatprep.subr.mxu0 0.0
          %474 = vmatpush2.msra.mxu0 0.0
          %475 = vmatprep.subr.mxu0 0.0
          %476 = vmatpush2.msra.mxu0 0.0
          %477 = vmatprep.subr.mxu0 0.0
          %478 = vmatpush2.msra.mxu0 0.0
          %479 = vmatprep.subr.mxu0 0.0
          %480 = vmatpush2.msra.mxu0 0.0
          %481 = vmatprep.subr.mxu0 0.0
          %482 = vmatpush2.msra.mxu0 0.0
          %483 = vmatprep.subr.mxu0 0.0
          %484 = vmatpush2.msra.mxu0 0.0
          %485 = vmatprep.subr.mxu0 0.0
          %486 = vmatpush2.msra.mxu0 0.0
          %487 = vmatprep.subr.mxu0 0.0
          %488 = vmatpush2.msra.mxu0 0.0
          %489 = vmatprep.subr.mxu0 0.0
          %490 = vmatpush2.msra.mxu0 0.0
          %491 = vmatprep.subr.mxu0 0.0
          %492 = vmatpush2.msra.mxu0 0.0
          %493 = vmatprep.subr.mxu0 0.0
          %494 = vmatpush2.msra.mxu0 0.0
          %495 = vmatprep.subr.mxu0 0.0
          %496 = vmatpush2.msra.mxu0 0.0
          %497 = vmatprep.subr.mxu0 0.0
          %498 = vmatpush2.msra.mxu0 0.0
          %499 = vmatprep.subr.mxu0 0.0
          %500 = vmatpush2.msra.mxu0 0.0
          %501 = vmatprep.mubr.f32.mxu0 0.0
          %502 = vmatmul.mubr.f32.gmra.mxu0 %v432
          %v503 = vpop.f32.mrf.mxu0
          %v504 = vadd.f32 0.0, %v503
          %v505 = vpop.f32.mrf.mxu0
          %506 = vmatprep.mubr.f32.mxu0 0.0
          %507 = vmatmul.mubr.f32.gmra.mxu0 %v435
          %v508 = vpop.f32.mrf.mxu0
          %v509 = vadd.f32 0.0, %v508
          %v510 = vpop.f32.mrf.mxu0
          %511 = vdwg.mxu0
          %v512 = vsel %vm378, 1, 0
          %vm513 = vcmp.eq.s32.totalorder %v512, 1
          %v514 = vsel %vm513, %v504, -1e+30
          %v515 = vsel %vm513, %v509, -1e+30
          %v516 = vmul.f32 %v426, %v426
          %v517 = vmul.f32 %v427, %v427
          %v518 = vsel %vm430, %v516, 0.0
          %519 = vadd.xlane.f32.xlu0 %v518
          %v520 = vpop.xlane.xlu0 %519
          %v521 = vsel %vm430, %v517, 0.0
          %522 = vadd.xlane.f32.xlu0 %v521
          %v523 = vpop.xlane.xlu0 %522
          %v524 = vmul.f32 %v520, 0.088388346
          %v525 = vmul.f32 %v523, 0.088388346
          %526 = vmax.xlane.f32.xlu0 %v514
          %v527 = vpop.xlane.xlu0 %526
          %528 = vmax.xlane.f32.xlu0 %v515
          %v529 = vpop.xlane.xlu0 %528
          %v530 = vrot.slane %v527, 4
          %v531 = vmax.f32 %v527, %v530
          %v532 = vrot.slane %v531, 2
          %v533 = vmax.f32 %v531, %v532
          %v534 = vrot.slane %v533, 1
          %v535 = vmax.f32 %v533, %v534
          %v536 = vrot.slane %v529, 4
          %v537 = vmax.f32 %v529, %v536
          %v538 = vrot.slane %v537, 2
          %v539 = vmax.f32 %v537, %v538
          %v540 = vrot.slane %v539, 1
          %v541 = vmax.f32 %v539, %v540
          %v542 = vld [vmem:[#allocation4] sm:$0x1]
          %v543 = vld [vmem:[#allocation4 + $0x1] sm:$0x1]
          %v544 = vmax.f32 %v542, %v535
          %v545 = vmax.f32 %v543, %v541
          %vm546 = vcmask 0
          %547 = vst.msk [vmem:[#allocation4] sm:$0x1] %vm546, %v544
          %548 = vst.msk [vmem:[#allocation4 + $0x1] sm:$0x1] %vm546, %v545
          %v549 = vsub.f32 %v542, %v544
          %v550 = vsub.f32 %v543, %v545
          %v551 = vmul.f32 %v549, 1.442695
          %v552 = vpow.pop %v551
          %v553 = vmul.f32 %v550, 1.442695
          %v554 = vpow.pop %v553
          %v557 = vlaneseq
          %v558 = vshrl.u32 %v557, 7
          %v559 = vsub.s32 0, %v558
          %v560 = vrot.slane %v544, %v559
          %v561 = vlaneseq
          %v562 = vshrl.u32 %v561, 7
          %v563 = vsub.s32 0, %v562
          %v564 = vrot.slane %v545, %v563
          %v567 = vadd.f32 %v524, %v560
          %v568 = vadd.f32 %v525, %v564
          %570 = vset.pattern.permute.xlu0 0
          %571 = vperm.xlu0 %570, %v567
          %v572 = vpop.permute.xlu0 %571
          %575 = vset.pattern.permute.xlu0 0
          %576 = vperm.xlu0 %575, %v568
          %v577 = vpop.permute.xlu0 %576
          %v579 = vsub.f32 %v514, %v572
          %v580 = vsub.f32 %v515, %v577
          %v581 = vmul.f32 %v579, 1.442695
          %v582 = vpow.pop %v581
          %v583 = vmul.f32 %v580, 1.442695
          %v584 = vpow.pop %v583
          %v585 = vsel %vm430, %v428, 1.0
          %v586 = vsel %vm430, %v429, 1.0
          %587 = vxpose.xlu0.b32.start [1/16] %v582, 128
          %588 = vxpose.xlu0.b32.cont [2/16] 0.0, 128
          %589 = vxpose.xlu0.b32.cont [3/16] 0.0, 128
          %590 = vxpose.xlu0.b32.cont [4/16] 0.0, 128
          %591 = vxpose.xlu0.b32.cont [5/16] 0.0, 128
          %592 = vxpose.xlu0.b32.cont [6/16] 0.0, 128
          %593 = vxpose.xlu0.b32.cont [7/16] 0.0, 128
          %594 = vxpose.xlu0.b32.cont [8/16] 0.0, 128
          %595 = vxpose.xlu0.b32.cont [9/16] 0.0, 128
          %596 = vxpose.xlu0.b32.cont [10/16] 0.0, 128
          %597 = vxpose.xlu0.b32.cont [11/16] 0.0, 128
          %598 = vxpose.xlu0.b32.cont [12/16] 0.0, 128
          %599 = vxpose.xlu0.b32.cont [13/16] 0.0, 128
          %600 = vxpose.xlu0.b32.cont [14/16] 0.0, 128
          %601 = vxpose.xlu0.b32.cont [15/16] 0.0, 128
          %602 = vxpose.xlu0.b32.end [16/16] 0.0, 128
          %v603 = vpop.trf.xlu0
          %v604 = vpop.trf.xlu0
          %v605 = vpop.trf.xlu0
          %v606 = vpop.trf.xlu0
          %v607 = vpop.trf.xlu0
          %v608 = vpop.trf.xlu0
          %v609 = vpop.trf.xlu0
          %v610 = vpop.trf.xlu0
          %v611 = vpop.trf.xlu0
          %v612 = vpop.trf.xlu0
          %v613 = vpop.trf.xlu0
          %v614 = vpop.trf.xlu0
          %v615 = vpop.trf.xlu0
          %v616 = vpop.trf.xlu0
          %v617 = vpop.trf.xlu0
          %v618 = vpop.trf.xlu0
          %vm619 = vcmask 64512
          %v621 = vsel %vm619, %v603, 0
          %v624 = vsel %vm619, %v604, 0
          %v627 = vsel %vm619, %v605, 0
          %v630 = vsel %vm619, %v606, 0
          %v633 = vsel %vm619, %v607, 0
          %v636 = vsel %vm619, %v608, 0
          %v639 = vsel %vm619, %v609, 0
          %v642 = vsel %vm619, %v610, 0
          %v645 = vsel %vm619, %v611, 0
          %v648 = vsel %vm619, %v612, 0
          %v651 = vsel %vm619, %v613, 0
          %v654 = vsel %vm619, %v614, 0
          %v657 = vsel %vm619, %v615, 0
          %v660 = vsel %vm619, %v616, 0
          %v663 = vsel %vm619, %v617, 0
          %v666 = vsel %vm619, %v618, 0
          %668 = vmatprep.subr.mxu0 0.0
          %669 = vmatpush1.msra.mxu0 0.0
          %670 = vmatprep.subr.mxu0 0.0
          %671 = vmatpush1.msra.mxu0 0.0
          %672 = vmatprep.subr.mxu0 0.0
          %673 = vmatpush1.msra.mxu0 0.0
          %674 = vmatprep.subr.mxu0 0.0
          %675 = vmatpush1.msra.mxu0 0.0
          %676 = vmatprep.subr.mxu0 0.0
          %677 = vmatpush1.msra.mxu0 0.0
          %678 = vmatprep.subr.mxu0 0.0
          %679 = vmatpush1.msra.mxu0 0.0
          %680 = vmatprep.subr.mxu0 0.0
          %681 = vmatpush1.msra.mxu0 0.0
          %682 = vmatprep.subr.mxu0 0.0
          %683 = vmatpush1.msra.mxu0 0.0
          %684 = vmatprep.subr.mxu0 0.0
          %685 = vmatpush1.msra.mxu0 0.0
          %686 = vmatprep.subr.mxu0 0.0
          %687 = vmatpush1.msra.mxu0 0.0
          %688 = vmatprep.subr.mxu0 0.0
          %689 = vmatpush1.msra.mxu0 0.0
          %690 = vmatprep.subr.mxu0 0.0
          %691 = vmatpush1.msra.mxu0 0.0
          %692 = vmatprep.subr.mxu0 0.0
          %693 = vmatpush1.msra.mxu0 0.0
          %694 = vmatprep.subr.mxu0 0.0
          %695 = vmatpush1.msra.mxu0 0.0
          %696 = vmatprep.subr.mxu0 0.0
          %697 = vmatpush1.msra.mxu0 0.0
          %698 = vmatprep.subr.mxu0 0.0
          %699 = vmatpush1.msra.mxu0 %v585
          %700 = vmatprep.subr.mxu0 0.0
          %701 = vmatpush2.msra.mxu0 0.0
          %702 = vmatprep.subr.mxu0 0.0
          %703 = vmatpush2.msra.mxu0 0.0
          %704 = vmatprep.subr.mxu0 0.0
          %705 = vmatpush2.msra.mxu0 0.0
          %706 = vmatprep.subr.mxu0 0.0
          %707 = vmatpush2.msra.mxu0 0.0
          %708 = vmatprep.subr.mxu0 0.0
          %709 = vmatpush2.msra.mxu0 0.0
          %710 = vmatprep.subr.mxu0 0.0
          %711 = vmatpush2.msra.mxu0 0.0
          %712 = vmatprep.subr.mxu0 0.0
          %713 = vmatpush2.msra.mxu0 0.0
          %714 = vmatprep.subr.mxu0 0.0
          %715 = vmatpush2.msra.mxu0 0.0
          %716 = vmatprep.subr.mxu0 0.0
          %717 = vmatpush2.msra.mxu0 0.0
          %718 = vmatprep.subr.mxu0 0.0
          %719 = vmatpush2.msra.mxu0 0.0
          %720 = vmatprep.subr.mxu0 0.0
          %721 = vmatpush2.msra.mxu0 0.0
          %722 = vmatprep.subr.mxu0 0.0
          %723 = vmatpush2.msra.mxu0 0.0
          %724 = vmatprep.subr.mxu0 0.0
          %725 = vmatpush2.msra.mxu0 0.0
          %726 = vmatprep.subr.mxu0 0.0
          %727 = vmatpush2.msra.mxu0 0.0
          %728 = vmatprep.subr.mxu0 0.0
          %729 = vmatpush2.msra.mxu0 0.0
          %730 = vmatprep.subr.mxu0 0.0
          %731 = vmatpush2.msra.mxu0 0.0
          %732 = vmatprep.mubr.f32.mxu0 0.0
          %733 = vmatmul.mubr.f32.gmra.mxu0 %v621
          %v734 = vpop.f32.mrf.mxu0
          %v735 = vadd.f32 0.0, %v734
          %v736 = vpop.f32.mrf.mxu0
          %737 = vmatprep.mubr.f32.mxu0 0.0
          %738 = vmatmul.mubr.f32.gmra.mxu0 %v624
          %v739 = vpop.f32.mrf.mxu0
          %v740 = vadd.f32 0.0, %v739
          %v741 = vpop.f32.mrf.mxu0
          %742 = vmatprep.mubr.f32.mxu0 0.0
          %743 = vmatmul.mubr.f32.gmra.mxu0 %v627
          %v744 = vpop.f32.mrf.mxu0
          %v745 = vadd.f32 0.0, %v744
          %v746 = vpop.f32.mrf.mxu0
          %747 = vmatprep.mubr.f32.mxu0 0.0
          %748 = vmatmul.mubr.f32.gmra.mxu0 %v630
          %v749 = vpop.f32.mrf.mxu0
          %v750 = vadd.f32 0.0, %v749
          %v751 = vpop.f32.mrf.mxu0
          %752 = vmatprep.mubr.f32.mxu0 0.0
          %753 = vmatmul.mubr.f32.gmra.mxu0 %v633
          %v754 = vpop.f32.mrf.mxu0
          %v755 = vadd.f32 0.0, %v754
          %v756 = vpop.f32.mrf.mxu0
          %757 = vmatprep.mubr.f32.mxu0 0.0
          %758 = vmatmul.mubr.f32.gmra.mxu0 %v636
          %v759 = vpop.f32.mrf.mxu0
          %v760 = vadd.f32 0.0, %v759
          %v761 = vpop.f32.mrf.mxu0
          %762 = vmatprep.mubr.f32.mxu0 0.0
          %763 = vmatmul.mubr.f32.gmra.mxu0 %v639
          %v764 = vpop.f32.mrf.mxu0
          %v765 = vadd.f32 0.0, %v764
          %v766 = vpop.f32.mrf.mxu0
          %767 = vmatprep.mubr.f32.mxu0 0.0
          %768 = vmatmul.mubr.f32.gmra.mxu0 %v642
          %v769 = vpop.f32.mrf.mxu0
          %v770 = vadd.f32 0.0, %v769
          %v771 = vpop.f32.mrf.mxu0
          %772 = vmatprep.mubr.f32.mxu0 0.0
          %773 = vmatmul.mubr.f32.gmra.mxu0 %v645
          %v774 = vpop.f32.mrf.mxu0
          %v775 = vadd.f32 0.0, %v774
          %v776 = vpop.f32.mrf.mxu0
          %777 = vmatprep.mubr.f32.mxu0 0.0
          %778 = vmatmul.mubr.f32.gmra.mxu0 %v648
          %v779 = vpop.f32.mrf.mxu0
          %v780 = vadd.f32 0.0, %v779
          %v781 = vpop.f32.mrf.mxu0
          %782 = vmatprep.mubr.f32.mxu0 0.0
          %783 = vmatmul.mubr.f32.gmra.mxu0 %v651
          %v784 = vpop.f32.mrf.mxu0
          %v785 = vadd.f32 0.0, %v784
          %v786 = vpop.f32.mrf.mxu0
          %787 = vmatprep.mubr.f32.mxu0 0.0
          %788 = vmatmul.mubr.f32.gmra.mxu0 %v654
          %v789 = vpop.f32.mrf.mxu0
          %v790 = vadd.f32 0.0, %v789
          %v791 = vpop.f32.mrf.mxu0
          %792 = vmatprep.mubr.f32.mxu0 0.0
          %793 = vmatmul.mubr.f32.gmra.mxu0 %v657
          %v794 = vpop.f32.mrf.mxu0
          %v795 = vadd.f32 0.0, %v794
          %v796 = vpop.f32.mrf.mxu0
          %797 = vmatprep.mubr.f32.mxu0 0.0
          %798 = vmatmul.mubr.f32.gmra.mxu0 %v660
          %v799 = vpop.f32.mrf.mxu0
          %v800 = vadd.f32 0.0, %v799
          %v801 = vpop.f32.mrf.mxu0
          %802 = vmatprep.mubr.f32.mxu0 0.0
          %803 = vmatmul.mubr.f32.gmra.mxu0 %v663
          %v804 = vpop.f32.mrf.mxu0
          %v805 = vadd.f32 0.0, %v804
          %v806 = vpop.f32.mrf.mxu0
          %807 = vmatprep.mubr.f32.mxu0 0.0
          %808 = vmatmul.mubr.f32.gmra.mxu0 %v666
          %v809 = vpop.f32.mrf.mxu0
          %v810 = vadd.f32 0.0, %v809
          %v811 = vpop.f32.mrf.mxu0
          %812 = vdwg.mxu0
          %813 = vxpose.xlu0.b32.start [1/16] %v584, 128
          %814 = vxpose.xlu0.b32.cont [2/16] 0.0, 128
          %815 = vxpose.xlu0.b32.cont [3/16] 0.0, 128
          %816 = vxpose.xlu0.b32.cont [4/16] 0.0, 128
          %817 = vxpose.xlu0.b32.cont [5/16] 0.0, 128
          %818 = vxpose.xlu0.b32.cont [6/16] 0.0, 128
          %819 = vxpose.xlu0.b32.cont [7/16] 0.0, 128
          %820 = vxpose.xlu0.b32.cont [8/16] 0.0, 128
          %821 = vxpose.xlu0.b32.cont [9/16] 0.0, 128
          %822 = vxpose.xlu0.b32.cont [10/16] 0.0, 128
          %823 = vxpose.xlu0.b32.cont [11/16] 0.0, 128
          %824 = vxpose.xlu0.b32.cont [12/16] 0.0, 128
          %825 = vxpose.xlu0.b32.cont [13/16] 0.0, 128
          %826 = vxpose.xlu0.b32.cont [14/16] 0.0, 128
          %827 = vxpose.xlu0.b32.cont [15/16] 0.0, 128
          %828 = vxpose.xlu0.b32.end [16/16] 0.0, 128
          %v829 = vpop.trf.xlu0
          %v830 = vpop.trf.xlu0
          %v831 = vpop.trf.xlu0
          %v832 = vpop.trf.xlu0
          %v833 = vpop.trf.xlu0
          %v834 = vpop.trf.xlu0
          %v835 = vpop.trf.xlu0
          %v836 = vpop.trf.xlu0
          %v837 = vpop.trf.xlu0
          %v838 = vpop.trf.xlu0
          %v839 = vpop.trf.xlu0
          %v840 = vpop.trf.xlu0
          %v841 = vpop.trf.xlu0
          %v842 = vpop.trf.xlu0
          %v843 = vpop.trf.xlu0
          %v844 = vpop.trf.xlu0
          %v846 = vsel %vm619, %v829, 0
          %v849 = vsel %vm619, %v830, 0
          %v852 = vsel %vm619, %v831, 0
          %v855 = vsel %vm619, %v832, 0
          %v858 = vsel %vm619, %v833, 0
          %v861 = vsel %vm619, %v834, 0
          %v864 = vsel %vm619, %v835, 0
          %v867 = vsel %vm619, %v836, 0
          %v870 = vsel %vm619, %v837, 0
          %v873 = vsel %vm619, %v838, 0
          %v876 = vsel %vm619, %v839, 0
          %v879 = vsel %vm619, %v840, 0
          %v882 = vsel %vm619, %v841, 0
          %v885 = vsel %vm619, %v842, 0
          %v888 = vsel %vm619, %v843, 0
          %v891 = vsel %vm619, %v844, 0
          %893 = vmatprep.subr.mxu0 0.0
          %894 = vmatpush1.msra.mxu0 0.0
          %895 = vmatprep.subr.mxu0 0.0
          %896 = vmatpush1.msra.mxu0 0.0
          %897 = vmatprep.subr.mxu0 0.0
          %898 = vmatpush1.msra.mxu0 0.0
          %899 = vmatprep.subr.mxu0 0.0
          %900 = vmatpush1.msra.mxu0 0.0
          %901 = vmatprep.subr.mxu0 0.0
          %902 = vmatpush1.msra.mxu0 0.0
          %903 = vmatprep.subr.mxu0 0.0
          %904 = vmatpush1.msra.mxu0 0.0
          %905 = vmatprep.subr.mxu0 0.0
          %906 = vmatpush1.msra.mxu0 0.0
          %907 = vmatprep.subr.mxu0 0.0
          %908 = vmatpush1.msra.mxu0 0.0
          %909 = vmatprep.subr.mxu0 0.0
          %910 = vmatpush1.msra.mxu0 0.0
          %911 = vmatprep.subr.mxu0 0.0
          %912 = vmatpush1.msra.mxu0 0.0
          %913 = vmatprep.subr.mxu0 0.0
          %914 = vmatpush1.msra.mxu0 0.0
          %915 = vmatprep.subr.mxu0 0.0
          %916 = vmatpush1.msra.mxu0 0.0
          %917 = vmatprep.subr.mxu0 0.0
          %918 = vmatpush1.msra.mxu0 0.0
          %919 = vmatprep.subr.mxu0 0.0
          %920 = vmatpush1.msra.mxu0 0.0
          %921 = vmatprep.subr.mxu0 0.0
          %922 = vmatpush1.msra.mxu0 0.0
          %923 = vmatprep.subr.mxu0 0.0
          %924 = vmatpush1.msra.mxu0 %v586
          %925 = vmatprep.subr.mxu0 0.0
          %926 = vmatpush2.msra.mxu0 0.0
          %927 = vmatprep.subr.mxu0 0.0
          %928 = vmatpush2.msra.mxu0 0.0
          %929 = vmatprep.subr.mxu0 0.0
          %930 = vmatpush2.msra.mxu0 0.0
          %931 = vmatprep.subr.mxu0 0.0
          %932 = vmatpush2.msra.mxu0 0.0
          %933 = vmatprep.subr.mxu0 0.0
          %934 = vmatpush2.msra.mxu0 0.0
          %935 = vmatprep.subr.mxu0 0.0
          %936 = vmatpush2.msra.mxu0 0.0
          %937 = vmatprep.subr.mxu0 0.0
          %938 = vmatpush2.msra.mxu0 0.0
          %939 = vmatprep.subr.mxu0 0.0
          %940 = vmatpush2.msra.mxu0 0.0
          %941 = vmatprep.subr.mxu0 0.0
          %942 = vmatpush2.msra.mxu0 0.0
          %943 = vmatprep.subr.mxu0 0.0
          %944 = vmatpush2.msra.mxu0 0.0
          %945 = vmatprep.subr.mxu0 0.0
          %946 = vmatpush2.msra.mxu0 0.0
          %947 = vmatprep.subr.mxu0 0.0
          %948 = vmatpush2.msra.mxu0 0.0
          %949 = vmatprep.subr.mxu0 0.0
          %950 = vmatpush2.msra.mxu0 0.0
          %951 = vmatprep.subr.mxu0 0.0
          %952 = vmatpush2.msra.mxu0 0.0
          %953 = vmatprep.subr.mxu0 0.0
          %954 = vmatpush2.msra.mxu0 0.0
          %955 = vmatprep.subr.mxu0 0.0
          %956 = vmatpush2.msra.mxu0 0.0
          %957 = vmatprep.mubr.f32.mxu0 0.0
          %958 = vmatmul.mubr.f32.gmra.mxu0 %v846
          %v959 = vpop.f32.mrf.mxu0
          %v960 = vadd.f32 0.0, %v959
          %v961 = vpop.f32.mrf.mxu0
          %962 = vmatprep.mubr.f32.mxu0 0.0
          %963 = vmatmul.mubr.f32.gmra.mxu0 %v849
          %v964 = vpop.f32.mrf.mxu0
          %v965 = vadd.f32 0.0, %v964
          %v966 = vpop.f32.mrf.mxu0
          %967 = vmatprep.mubr.f32.mxu0 0.0
          %968 = vmatmul.mubr.f32.gmra.mxu0 %v852
          %v969 = vpop.f32.mrf.mxu0
          %v970 = vadd.f32 0.0, %v969
          %v971 = vpop.f32.mrf.mxu0
          %972 = vmatprep.mubr.f32.mxu0 0.0
          %973 = vmatmul.mubr.f32.gmra.mxu0 %v855
          %v974 = vpop.f32.mrf.mxu0
          %v975 = vadd.f32 0.0, %v974
          %v976 = vpop.f32.mrf.mxu0
          %977 = vmatprep.mubr.f32.mxu0 0.0
          %978 = vmatmul.mubr.f32.gmra.mxu0 %v858
          %v979 = vpop.f32.mrf.mxu0
          %v980 = vadd.f32 0.0, %v979
          %v981 = vpop.f32.mrf.mxu0
          %982 = vmatprep.mubr.f32.mxu0 0.0
          %983 = vmatmul.mubr.f32.gmra.mxu0 %v861
          %v984 = vpop.f32.mrf.mxu0
          %v985 = vadd.f32 0.0, %v984
          %v986 = vpop.f32.mrf.mxu0
          %987 = vmatprep.mubr.f32.mxu0 0.0
          %988 = vmatmul.mubr.f32.gmra.mxu0 %v864
          %v989 = vpop.f32.mrf.mxu0
          %v990 = vadd.f32 0.0, %v989
          %v991 = vpop.f32.mrf.mxu0
          %992 = vmatprep.mubr.f32.mxu0 0.0
          %993 = vmatmul.mubr.f32.gmra.mxu0 %v867
          %v994 = vpop.f32.mrf.mxu0
          %v995 = vadd.f32 0.0, %v994
          %v996 = vpop.f32.mrf.mxu0
          %997 = vmatprep.mubr.f32.mxu0 0.0
          %998 = vmatmul.mubr.f32.gmra.mxu0 %v870
          %v999 = vpop.f32.mrf.mxu0
          %v1000 = vadd.f32 0.0, %v999
          %v1001 = vpop.f32.mrf.mxu0
          %1002 = vmatprep.mubr.f32.mxu0 0.0
          %1003 = vmatmul.mubr.f32.gmra.mxu0 %v873
          %v1004 = vpop.f32.mrf.mxu0
          %v1005 = vadd.f32 0.0, %v1004
          %v1006 = vpop.f32.mrf.mxu0
          %1007 = vmatprep.mubr.f32.mxu0 0.0
          %1008 = vmatmul.mubr.f32.gmra.mxu0 %v876
          %v1009 = vpop.f32.mrf.mxu0
          %v1010 = vadd.f32 0.0, %v1009
          %v1011 = vpop.f32.mrf.mxu0
          %1012 = vmatprep.mubr.f32.mxu0 0.0
          %1013 = vmatmul.mubr.f32.gmra.mxu0 %v879
          %v1014 = vpop.f32.mrf.mxu0
          %v1015 = vadd.f32 0.0, %v1014
          %v1016 = vpop.f32.mrf.mxu0
          %1017 = vmatprep.mubr.f32.mxu0 0.0
          %1018 = vmatmul.mubr.f32.gmra.mxu0 %v882
          %v1019 = vpop.f32.mrf.mxu0
          %v1020 = vadd.f32 0.0, %v1019
          %v1021 = vpop.f32.mrf.mxu0
          %1022 = vmatprep.mubr.f32.mxu0 0.0
          %1023 = vmatmul.mubr.f32.gmra.mxu0 %v885
          %v1024 = vpop.f32.mrf.mxu0
          %v1025 = vadd.f32 0.0, %v1024
          %v1026 = vpop.f32.mrf.mxu0
          %1027 = vmatprep.mubr.f32.mxu0 0.0
          %1028 = vmatmul.mubr.f32.gmra.mxu0 %v888
          %v1029 = vpop.f32.mrf.mxu0
          %v1030 = vadd.f32 0.0, %v1029
          %v1031 = vpop.f32.mrf.mxu0
          %1032 = vmatprep.mubr.f32.mxu0 0.0
          %1033 = vmatmul.mubr.f32.gmra.mxu0 %v891
          %v1034 = vpop.f32.mrf.mxu0
          %v1035 = vadd.f32 0.0, %v1034
          %v1036 = vpop.f32.mrf.mxu0
          %1037 = vdwg.mxu0
          %v1038 = vld [vmem:[#allocation2] sm:$0xff]
          %v1039 = vld [vmem:[#allocation2 + $0x8] sm:$0xff]
          %v1040 = vld [vmem:[#allocation2 + $0x10] sm:$0xff]
          %v1041 = vld [vmem:[#allocation2 + $0x18] sm:$0xff]
          %v1042 = vld [vmem:[#allocation2 + $0x20] sm:$0xff]
          %v1043 = vld [vmem:[#allocation2 + $0x28] sm:$0xff]
          %v1044 = vld [vmem:[#allocation2 + $0x30] sm:$0xff]
          %v1045 = vld [vmem:[#allocation2 + $0x38] sm:$0xff]
          %v1046 = vld [vmem:[#allocation2 + $0x40] sm:$0xff]
          %v1047 = vld [vmem:[#allocation2 + $0x48] sm:$0xff]
          %v1048 = vld [vmem:[#allocation2 + $0x50] sm:$0xff]
          %v1049 = vld [vmem:[#allocation2 + $0x58] sm:$0xff]
          %v1050 = vld [vmem:[#allocation2 + $0x60] sm:$0xff]
          %v1051 = vld [vmem:[#allocation2 + $0x68] sm:$0xff]
          %v1052 = vld [vmem:[#allocation2 + $0x70] sm:$0xff]
          %v1053 = vld [vmem:[#allocation2 + $0x78] sm:$0xff]
          %v1054 = vld [vmem:[#allocation2 + $0x80] sm:$0xff]
          %v1055 = vld [vmem:[#allocation2 + $0x88] sm:$0xff]
          %v1056 = vld [vmem:[#allocation2 + $0x90] sm:$0xff]
          %v1057 = vld [vmem:[#allocation2 + $0x98] sm:$0xff]
          %v1058 = vld [vmem:[#allocation2 + $0xa0] sm:$0xff]
          %v1059 = vld [vmem:[#allocation2 + $0xa8] sm:$0xff]
          %v1060 = vld [vmem:[#allocation2 + $0xb0] sm:$0xff]
          %v1061 = vld [vmem:[#allocation2 + $0xb8] sm:$0xff]
          %v1062 = vld [vmem:[#allocation2 + $0xc0] sm:$0xff]
          %v1063 = vld [vmem:[#allocation2 + $0xc8] sm:$0xff]
          %v1064 = vld [vmem:[#allocation2 + $0xd0] sm:$0xff]
          %v1065 = vld [vmem:[#allocation2 + $0xd8] sm:$0xff]
          %v1066 = vld [vmem:[#allocation2 + $0xe0] sm:$0xff]
          %v1067 = vld [vmem:[#allocation2 + $0xe8] sm:$0xff]
          %v1068 = vld [vmem:[#allocation2 + $0xf0] sm:$0xff]
          %v1069 = vld [vmem:[#allocation2 + $0xf8] sm:$0xff]
          %v1072 = vlaneseq
          %v1073 = vshrl.u32 %v1072, 7
          %v1074 = vsub.s32 0, %v1073
          %v1075 = vrot.slane %v552, %v1074
          %v1076 = vlaneseq
          %v1077 = vshrl.u32 %v1076, 7
          %v1078 = vsub.s32 0, %v1077
          %v1079 = vrot.slane %v554, %v1078
          %1080 = vset.pattern.permute.xlu0 0
          %1081 = vperm.xlu0 %1080, %v1075
          %v1082 = vpop.permute.xlu0 %1081
          %1084 = vset.pattern.permute.xlu0 0
          %1085 = vperm.xlu0 %1084, %v1079
          %v1086 = vpop.permute.xlu0 %1085
          %v1088 = vmul.f32 %v1038, %v1082
          %v1089 = vmul.f32 %v1039, %v1082
          %v1090 = vmul.f32 %v1040, %v1082
          %v1091 = vmul.f32 %v1041, %v1082
          %v1092 = vmul.f32 %v1042, %v1082
          %v1093 = vmul.f32 %v1043, %v1082
          %v1094 = vmul.f32 %v1044, %v1082
          %v1095 = vmul.f32 %v1045, %v1082
          %v1096 = vmul.f32 %v1046, %v1082
          %v1097 = vmul.f32 %v1047, %v1082
          %v1098 = vmul.f32 %v1048, %v1082
          %v1099 = vmul.f32 %v1049, %v1082
          %v1100 = vmul.f32 %v1050, %v1082
          %v1101 = vmul.f32 %v1051, %v1082
          %v1102 = vmul.f32 %v1052, %v1082
          %v1103 = vmul.f32 %v1053, %v1082
          %v1104 = vmul.f32 %v1054, %v1086
          %v1105 = vmul.f32 %v1055, %v1086
          %v1106 = vmul.f32 %v1056, %v1086
          %v1107 = vmul.f32 %v1057, %v1086
          %v1108 = vmul.f32 %v1058, %v1086
          %v1109 = vmul.f32 %v1059, %v1086
          %v1110 = vmul.f32 %v1060, %v1086
          %v1111 = vmul.f32 %v1061, %v1086
          %v1112 = vmul.f32 %v1062, %v1086
          %v1113 = vmul.f32 %v1063, %v1086
          %v1114 = vmul.f32 %v1064, %v1086
          %v1115 = vmul.f32 %v1065, %v1086
          %v1116 = vmul.f32 %v1066, %v1086
          %v1117 = vmul.f32 %v1067, %v1086
          %v1118 = vmul.f32 %v1068, %v1086
          %v1119 = vmul.f32 %v1069, %v1086
          %v1120 = vadd.f32 %v1088, %v735
          %v1121 = vadd.f32 %v1089, %v740
          %v1122 = vadd.f32 %v1090, %v745
          %v1123 = vadd.f32 %v1091, %v750
          %v1124 = vadd.f32 %v1092, %v755
          %v1125 = vadd.f32 %v1093, %v760
          %v1126 = vadd.f32 %v1094, %v765
          %v1127 = vadd.f32 %v1095, %v770
          %v1128 = vadd.f32 %v1096, %v775
          %v1129 = vadd.f32 %v1097, %v780
          %v1130 = vadd.f32 %v1098, %v785
          %v1131 = vadd.f32 %v1099, %v790
          %v1132 = vadd.f32 %v1100, %v795
          %v1133 = vadd.f32 %v1101, %v800
          %v1134 = vadd.f32 %v1102, %v805
          %v1135 = vadd.f32 %v1103, %v810
          %v1136 = vadd.f32 %v1104, %v960
          %v1137 = vadd.f32 %v1105, %v965
          %v1138 = vadd.f32 %v1106, %v970
          %v1139 = vadd.f32 %v1107, %v975
          %v1140 = vadd.f32 %v1108, %v980
          %v1141 = vadd.f32 %v1109, %v985
          %v1142 = vadd.f32 %v1110, %v990
          %v1143 = vadd.f32 %v1111, %v995
          %v1144 = vadd.f32 %v1112, %v1000
          %v1145 = vadd.f32 %v1113, %v1005
          %v1146 = vadd.f32 %v1114, %v1010
          %v1147 = vadd.f32 %v1115, %v1015
          %v1148 = vadd.f32 %v1116, %v1020
          %v1149 = vadd.f32 %v1117, %v1025
          %v1150 = vadd.f32 %v1118, %v1030
          %v1151 = vadd.f32 %v1119, %v1035
          %vm1152 = vcmask 269312
          %1153 = vst.msk [vmem:[#allocation2] sm:$0xff] %vm1152, %v1120
          %1154 = vst.msk [vmem:[#allocation2 + $0x8] sm:$0xff] %vm1152, %v1121
          %1155 = vst.msk [vmem:[#allocation2 + $0x10] sm:$0xff] %vm1152, %v1122
          %1156 = vst.msk [vmem:[#allocation2 + $0x18] sm:$0xff] %vm1152, %v1123
          %1157 = vst.msk [vmem:[#allocation2 + $0x20] sm:$0xff] %vm1152, %v1124
          %1158 = vst.msk [vmem:[#allocation2 + $0x28] sm:$0xff] %vm1152, %v1125
          %1159 = vst.msk [vmem:[#allocation2 + $0x30] sm:$0xff] %vm1152, %v1126
          %1160 = vst.msk [vmem:[#allocation2 + $0x38] sm:$0xff] %vm1152, %v1127
          %1161 = vst.msk [vmem:[#allocation2 + $0x40] sm:$0xff] %vm1152, %v1128
          %1162 = vst.msk [vmem:[#allocation2 + $0x48] sm:$0xff] %vm1152, %v1129
          %1163 = vst.msk [vmem:[#allocation2 + $0x50] sm:$0xff] %vm1152, %v1130
          %1164 = vst.msk [vmem:[#allocation2 + $0x58] sm:$0xff] %vm1152, %v1131
          %1165 = vst.msk [vmem:[#allocation2 + $0x60] sm:$0xff] %vm1152, %v1132
          %1166 = vst.msk [vmem:[#allocation2 + $0x68] sm:$0xff] %vm1152, %v1133
          %1167 = vst.msk [vmem:[#allocation2 + $0x70] sm:$0xff] %vm1152, %v1134
          %1168 = vst.msk [vmem:[#allocation2 + $0x78] sm:$0xff] %vm1152, %v1135
          %1169 = vst.msk [vmem:[#allocation2 + $0x80] sm:$0xff] %vm1152, %v1136
          %1170 = vst.msk [vmem:[#allocation2 + $0x88] sm:$0xff] %vm1152, %v1137
          %1171 = vst.msk [vmem:[#allocation2 + $0x90] sm:$0xff] %vm1152, %v1138
          %1172 = vst.msk [vmem:[#allocation2 + $0x98] sm:$0xff] %vm1152, %v1139
          %1173 = vst.msk [vmem:[#allocation2 + $0xa0] sm:$0xff] %vm1152, %v1140
          %1174 = vst.msk [vmem:[#allocation2 + $0xa8] sm:$0xff] %vm1152, %v1141
          %1175 = vst.msk [vmem:[#allocation2 + $0xb0] sm:$0xff] %vm1152, %v1142
          %1176 = vst.msk [vmem:[#allocation2 + $0xb8] sm:$0xff] %vm1152, %v1143
          %1177 = vst.msk [vmem:[#allocation2 + $0xc0] sm:$0xff] %vm1152, %v1144
          %1178 = vst.msk [vmem:[#allocation2 + $0xc8] sm:$0xff] %vm1152, %v1145
          %1179 = vst.msk [vmem:[#allocation2 + $0xd0] sm:$0xff] %vm1152, %v1146
          %1180 = vst.msk [vmem:[#allocation2 + $0xd8] sm:$0xff] %vm1152, %v1147
          %1181 = vst.msk [vmem:[#allocation2 + $0xe0] sm:$0xff] %vm1152, %v1148
          %1182 = vst.msk [vmem:[#allocation2 + $0xe8] sm:$0xff] %vm1152, %v1149
          %1183 = vst.msk [vmem:[#allocation2 + $0xf0] sm:$0xff] %vm1152, %v1150
          %1184 = vst.msk [vmem:[#allocation2 + $0xf8] sm:$0xff] %vm1152, %v1151
          %v1185 = vld [vmem:[#allocation3] sm:$0x1]
          %v1186 = vld [vmem:[#allocation3 + $0x1] sm:$0x1]
          %v1187 = vsel %vm1152, %v585, 0.0
          %v1188 = vrot.slane %v1187, 4
          %v1189 = vadd.f32 %v1187, %v1188
          %v1190 = vrot.slane %v1189, 2
          %v1191 = vadd.f32 %v1189, %v1190
          %v1192 = vrot.slane %v1191, 1
          %v1193 = vadd.f32 %v1191, %v1192
          %v1194 = vsel %vm1152, %v586, 0.0
          %v1195 = vrot.slane %v1194, 4
          %v1196 = vadd.f32 %v1194, %v1195
          %v1197 = vrot.slane %v1196, 2
          %v1198 = vadd.f32 %v1196, %v1197
          %v1199 = vrot.slane %v1198, 1
          %v1200 = vadd.f32 %v1198, %v1199
          %v1201 = vadd.f32 %v1185, %v1193
          %v1202 = vadd.f32 %v1186, %v1200
          %vm1203 = vcmask 262144
          %1204 = vst.msk [vmem:[#allocation3] sm:$0x1] %vm1203, %v1201
          %1205 = vst.msk [vmem:[#allocation3 + $0x1] sm:$0x1] %vm1203, %v1202
        $region60: #{tpu_custom_call.1} parent=35 // pred_fallthru
          _
        %p1206 = scmp.eq.s32.totalorder %s30, 1
        // Predicated region
        $region61: #{tpu_custom_call.1} parent=35 // pred_check
          %p1207 = pneg %p1206
        $region62: #{tpu_custom_call.1} parent=35 // pred_check_branch
          %1209 = sbr.rel (%p1207) target = $region64
        $region63: #{tpu_custom_call.1} parent=35 // pred_region
          %v1210 = vlaneseq
          %v1211 = vshrl.u32 %v1210, 7
          %v1212 = vadd.s32 %v1211, 8
          %v1213 = vadd.s32 %v1211, 16
          %v1214 = vadd.s32 %v1211, 24
          %v1215 = vadd.s32 %v1211, 32
          %v1216 = vadd.s32 %v1211, 40
          %v1217 = vadd.s32 %v1211, 48
          %v1218 = vadd.s32 %v1211, 56
          %v1219 = vadd.s32 %v1211, 64
          %v1220 = vadd.s32 %v1211, 72
          %v1221 = vadd.s32 %v1211, 80
          %v1222 = vadd.s32 %v1211, 88
          %v1223 = vadd.s32 %v1211, 96
          %v1224 = vadd.s32 %v1211, 104
          %v1225 = vadd.s32 %v1211, 112
          %v1226 = vadd.s32 %v1211, 120
          %vm1227 = vcmp.lt.s32.totalorder %v1211, 110
          %vm1228 = vcmp.lt.s32.totalorder %v1212, 110
          %vm1229 = vcmp.lt.s32.totalorder %v1213, 110
          %vm1230 = vcmp.lt.s32.totalorder %v1214, 110
          %vm1231 = vcmp.lt.s32.totalorder %v1215, 110
          %vm1232 = vcmp.lt.s32.totalorder %v1216, 110
          %vm1233 = vcmp.lt.s32.totalorder %v1217, 110
          %vm1234 = vcmp.lt.s32.totalorder %v1218, 110
          %vm1235 = vcmp.lt.s32.totalorder %v1219, 110
          %vm1236 = vcmp.lt.s32.totalorder %v1220, 110
          %vm1237 = vcmp.lt.s32.totalorder %v1221, 110
          %vm1238 = vcmp.lt.s32.totalorder %v1222, 110
          %vm1239 = vcmp.lt.s32.totalorder %v1223, 110
          %vm1240 = vcmp.lt.s32.totalorder %v1224, 110
          %vm1241 = vcmp.lt.s32.totalorder %v1225, 110
          %vm1242 = vcmp.lt.s32.totalorder %v1226, 110
          %v1243 = vsel %vm1227, 9.534626e-06, 0.0
          %v1244 = vsel %vm1228, 9.534626e-06, 0.0
          %v1245 = vsel %vm1229, 9.534626e-06, 0.0
          %v1246 = vsel %vm1230, 9.534626e-06, 0.0
          %v1247 = vsel %vm1231, 9.534626e-06, 0.0
          %v1248 = vsel %vm1232, 9.534626e-06, 0.0
          %v1249 = vsel %vm1233, 9.534626e-06, 0.0
          %v1250 = vsel %vm1234, 9.534626e-06, 0.0
          %v1251 = vsel %vm1235, 9.534626e-06, 0.0
          %v1252 = vsel %vm1236, 9.534626e-06, 0.0
          %v1253 = vsel %vm1237, 9.534626e-06, 0.0
          %v1254 = vsel %vm1238, 9.534626e-06, 0.0
          %v1255 = vsel %vm1239, 9.534626e-06, 0.0
          %v1256 = vsel %vm1240, 9.534626e-06, 0.0
          %v1257 = vsel %vm1241, 9.534626e-06, 0.0
          %v1258 = vsel %vm1242, 9.534626e-06, 0.0
          %v1259 = vld [vmem:[#allocation2] sm:$0xff]
          %v1260 = vld [vmem:[#allocation2 + $0x8] sm:$0xff]
          %v1261 = vld [vmem:[#allocation2 + $0x10] sm:$0xff]
          %v1262 = vld [vmem:[#allocation2 + $0x18] sm:$0xff]
          %v1263 = vld [vmem:[#allocation2 + $0x20] sm:$0xff]
          %v1264 = vld [vmem:[#allocation2 + $0x28] sm:$0xff]
          %v1265 = vld [vmem:[#allocation2 + $0x30] sm:$0xff]
          %v1266 = vld [vmem:[#allocation2 + $0x38] sm:$0xff]
          %v1267 = vld [vmem:[#allocation2 + $0x40] sm:$0xff]
          %v1268 = vld [vmem:[#allocation2 + $0x48] sm:$0xff]
          %v1269 = vld [vmem:[#allocation2 + $0x50] sm:$0xff]
          %v1270 = vld [vmem:[#allocation2 + $0x58] sm:$0xff]
          %v1271 = vld [vmem:[#allocation2 + $0x60] sm:$0xff]
          %v1272 = vld [vmem:[#allocation2 + $0x68] sm:$0xff]
          %v1273 = vld [vmem:[#allocation2 + $0x70] sm:$0xff]
          %v1274 = vld [vmem:[#allocation2 + $0x78] sm:$0xff]
          %v1275 = vld [vmem:[#allocation2 + $0x80] sm:$0xff]
          %v1276 = vld [vmem:[#allocation2 + $0x88] sm:$0xff]
          %v1277 = vld [vmem:[#allocation2 + $0x90] sm:$0xff]
          %v1278 = vld [vmem:[#allocation2 + $0x98] sm:$0xff]
          %v1279 = vld [vmem:[#allocation2 + $0xa0] sm:$0xff]
          %v1280 = vld [vmem:[#allocation2 + $0xa8] sm:$0xff]
          %v1281 = vld [vmem:[#allocation2 + $0xb0] sm:$0xff]
          %v1282 = vld [vmem:[#allocation2 + $0xb8] sm:$0xff]
          %v1283 = vld [vmem:[#allocation2 + $0xc0] sm:$0xff]
          %v1284 = vld [vmem:[#allocation2 + $0xc8] sm:$0xff]
          %v1285 = vld [vmem:[#allocation2 + $0xd0] sm:$0xff]
          %v1286 = vld [vmem:[#allocation2 + $0xd8] sm:$0xff]
          %v1287 = vld [vmem:[#allocation2 + $0xe0] sm:$0xff]
          %v1288 = vld [vmem:[#allocation2 + $0xe8] sm:$0xff]
          %v1289 = vld [vmem:[#allocation2 + $0xf0] sm:$0xff]
          %v1290 = vld [vmem:[#allocation2 + $0xf8] sm:$0xff]
          %v1291 = vmul.f32 %v1259, 0.09534626
          %v1292 = vmul.f32 %v1260, 0.09534626
          %v1293 = vmul.f32 %v1261, 0.09534626
          %v1294 = vmul.f32 %v1262, 0.09534626
          %v1295 = vmul.f32 %v1263, 0.09534626
          %v1296 = vmul.f32 %v1264, 0.09534626
          %v1297 = vmul.f32 %v1265, 0.09534626
          %v1298 = vmul.f32 %v1266, 0.09534626
          %v1299 = vmul.f32 %v1267, 0.09534626
          %v1300 = vmul.f32 %v1268, 0.09534626
          %v1301 = vmul.f32 %v1269, 0.09534626
          %v1302 = vmul.f32 %v1270, 0.09534626
          %v1303 = vmul.f32 %v1271, 0.09534626
          %v1304 = vmul.f32 %v1272, 0.09534626
          %v1305 = vmul.f32 %v1273, 0.09534626
          %v1306 = vmul.f32 %v1274, 0.09534626
          %v1307 = vmul.f32 %v1275, 0.09534626
          %v1308 = vmul.f32 %v1276, 0.09534626
          %v1309 = vmul.f32 %v1277, 0.09534626
          %v1310 = vmul.f32 %v1278, 0.09534626
          %v1311 = vmul.f32 %v1279, 0.09534626
          %v1312 = vmul.f32 %v1280, 0.09534626
          %v1313 = vmul.f32 %v1281, 0.09534626
          %v1314 = vmul.f32 %v1282, 0.09534626
          %v1315 = vmul.f32 %v1283, 0.09534626
          %v1316 = vmul.f32 %v1284, 0.09534626
          %v1317 = vmul.f32 %v1285, 0.09534626
          %v1318 = vmul.f32 %v1286, 0.09534626
          %v1319 = vmul.f32 %v1287, 0.09534626
          %v1320 = vmul.f32 %v1288, 0.09534626
          %v1321 = vmul.f32 %v1289, 0.09534626
          %v1322 = vmul.f32 %v1290, 0.09534626
          %v1323 = vld [vmem:[#allocation3] sm:$0x1]
          %v1324 = vld [vmem:[#allocation3 + $0x1] sm:$0x1]
          %v1327 = vlaneseq
          %v1328 = vshrl.u32 %v1327, 7
          %v1329 = vsub.s32 0, %v1328
          %v1330 = vrot.slane %v1323, %v1329
          %v1331 = vlaneseq
          %v1332 = vshrl.u32 %v1331, 7
          %v1333 = vsub.s32 0, %v1332
          %v1334 = vrot.slane %v1324, %v1333
          %v1337 = vmul.f32 %v1243, %v1330
          %v1338 = vmul.f32 %v1244, %v1330
          %v1339 = vmul.f32 %v1245, %v1330
          %v1340 = vmul.f32 %v1246, %v1330
          %v1341 = vmul.f32 %v1247, %v1330
          %v1342 = vmul.f32 %v1248, %v1330
          %v1343 = vmul.f32 %v1249, %v1330
          %v1344 = vmul.f32 %v1250, %v1330
          %v1345 = vmul.f32 %v1251, %v1330
          %v1346 = vmul.f32 %v1252, %v1330
          %v1347 = vmul.f32 %v1253, %v1330
          %v1348 = vmul.f32 %v1254, %v1330
          %v1349 = vmul.f32 %v1255, %v1330
          %v1350 = vmul.f32 %v1256, %v1330
          %v1351 = vmul.f32 %v1257, %v1330
          %v1352 = vmul.f32 %v1258, %v1330
          %v1353 = vmul.f32 %v1243, %v1334
          %v1354 = vmul.f32 %v1244, %v1334
          %v1355 = vmul.f32 %v1245, %v1334
          %v1356 = vmul.f32 %v1246, %v1334
          %v1357 = vmul.f32 %v1247, %v1334
          %v1358 = vmul.f32 %v1248, %v1334
          %v1359 = vmul.f32 %v1249, %v1334
          %v1360 = vmul.f32 %v1250, %v1334
          %v1361 = vmul.f32 %v1251, %v1334
          %v1362 = vmul.f32 %v1252, %v1334
          %v1363 = vmul.f32 %v1253, %v1334
          %v1364 = vmul.f32 %v1254, %v1334
          %v1365 = vmul.f32 %v1255, %v1334
          %v1366 = vmul.f32 %v1256, %v1334
          %v1367 = vmul.f32 %v1257, %v1334
          %v1368 = vmul.f32 %v1258, %v1334
          %v1369 = vadd.f32 %v1291, %v1337
          %v1370 = vadd.f32 %v1292, %v1338
          %v1371 = vadd.f32 %v1293, %v1339
          %v1372 = vadd.f32 %v1294, %v1340
          %v1373 = vadd.f32 %v1295, %v1341
          %v1374 = vadd.f32 %v1296, %v1342
          %v1375 = vadd.f32 %v1297, %v1343
          %v1376 = vadd.f32 %v1298, %v1344
          %v1377 = vadd.f32 %v1299, %v1345
          %v1378 = vadd.f32 %v1300, %v1346
          %v1379 = vadd.f32 %v1301, %v1347
          %v1380 = vadd.f32 %v1302, %v1348
          %v1381 = vadd.f32 %v1303, %v1349
          %v1382 = vadd.f32 %v1304, %v1350
          %v1383 = vadd.f32 %v1305, %v1351
          %v1384 = vadd.f32 %v1306, %v1352
          %v1385 = vadd.f32 %v1307, %v1353
          %v1386 = vadd.f32 %v1308, %v1354
          %v1387 = vadd.f32 %v1309, %v1355
          %v1388 = vadd.f32 %v1310, %v1356
          %v1389 = vadd.f32 %v1311, %v1357
          %v1390 = vadd.f32 %v1312, %v1358
          %v1391 = vadd.f32 %v1313, %v1359
          %v1392 = vadd.f32 %v1314, %v1360
          %v1393 = vadd.f32 %v1315, %v1361
          %v1394 = vadd.f32 %v1316, %v1362
          %v1395 = vadd.f32 %v1317, %v1363
          %v1396 = vadd.f32 %v1318, %v1364
          %v1397 = vadd.f32 %v1319, %v1365
          %v1398 = vadd.f32 %v1320, %v1366
          %v1399 = vadd.f32 %v1321, %v1367
          %v1400 = vadd.f32 %v1322, %v1368
          %vm1401 = vcmask 269312
          %1402 = vst.msk [vmem:[#allocation2] sm:$0xff] %vm1401, %v1369
          %1403 = vst.msk [vmem:[#allocation2 + $0x8] sm:$0xff] %vm1401, %v1370
          %1404 = vst.msk [vmem:[#allocation2 + $0x10] sm:$0xff] %vm1401, %v1371
          %1405 = vst.msk [vmem:[#allocation2 + $0x18] sm:$0xff] %vm1401, %v1372
          %1406 = vst.msk [vmem:[#allocation2 + $0x20] sm:$0xff] %vm1401, %v1373
          %1407 = vst.msk [vmem:[#allocation2 + $0x28] sm:$0xff] %vm1401, %v1374
          %1408 = vst.msk [vmem:[#allocation2 + $0x30] sm:$0xff] %vm1401, %v1375
          %1409 = vst.msk [vmem:[#allocation2 + $0x38] sm:$0xff] %vm1401, %v1376
          %1410 = vst.msk [vmem:[#allocation2 + $0x40] sm:$0xff] %vm1401, %v1377
          %1411 = vst.msk [vmem:[#allocation2 + $0x48] sm:$0xff] %vm1401, %v1378
          %1412 = vst.msk [vmem:[#allocation2 + $0x50] sm:$0xff] %vm1401, %v1379
          %1413 = vst.msk [vmem:[#allocation2 + $0x58] sm:$0xff] %vm1401, %v1380
          %1414 = vst.msk [vmem:[#allocation2 + $0x60] sm:$0xff] %vm1401, %v1381
          %1415 = vst.msk [vmem:[#allocation2 + $0x68] sm:$0xff] %vm1401, %v1382
          %1416 = vst.msk [vmem:[#allocation2 + $0x70] sm:$0xff] %vm1401, %v1383
          %1417 = vst.msk [vmem:[#allocation2 + $0x78] sm:$0xff] %vm1401, %v1384
          %1418 = vst.msk [vmem:[#allocation2 + $0x80] sm:$0xff] %vm1401, %v1385
          %1419 = vst.msk [vmem:[#allocation2 + $0x88] sm:$0xff] %vm1401, %v1386
          %1420 = vst.msk [vmem:[#allocation2 + $0x90] sm:$0xff] %vm1401, %v1387
          %1421 = vst.msk [vmem:[#allocation2 + $0x98] sm:$0xff] %vm1401, %v1388
          %1422 = vst.msk [vmem:[#allocation2 + $0xa0] sm:$0xff] %vm1401, %v1389
          %1423 = vst.msk [vmem:[#allocation2 + $0xa8] sm:$0xff] %vm1401, %v1390
          %1424 = vst.msk [vmem:[#allocation2 + $0xb0] sm:$0xff] %vm1401, %v1391
          %1425 = vst.msk [vmem:[#allocation2 + $0xb8] sm:$0xff] %vm1401, %v1392
          %1426 = vst.msk [vmem:[#allocation2 + $0xc0] sm:$0xff] %vm1401, %v1393
          %1427 = vst.msk [vmem:[#allocation2 + $0xc8] sm:$0xff] %vm1401, %v1394
          %1428 = vst.msk [vmem:[#allocation2 + $0xd0] sm:$0xff] %vm1401, %v1395
          %1429 = vst.msk [vmem:[#allocation2 + $0xd8] sm:$0xff] %vm1401, %v1396
          %1430 = vst.msk [vmem:[#allocation2 + $0xe0] sm:$0xff] %vm1401, %v1397
          %1431 = vst.msk [vmem:[#allocation2 + $0xe8] sm:$0xff] %vm1401, %v1398
          %1432 = vst.msk [vmem:[#allocation2 + $0xf0] sm:$0xff] %vm1401, %v1399
          %1433 = vst.msk [vmem:[#allocation2 + $0xf8] sm:$0xff] %vm1401, %v1400
        $region64: #{tpu_custom_call.1} parent=35 // pred_fallthru
          _
        %p1434 = scmp.ge.s32.totalorder %s30, 1
        // Predicated region
        $region65: #{tpu_custom_call.1} parent=35 // pred_check
          %p1435 = pneg %p1434
        $region66: #{tpu_custom_call.1} parent=35 // pred_check_branch
          %1437 = sbr.rel (%p1435) target = $region68
        $region67: #{tpu_custom_call.1} parent=35 // pred_region
          %v1438 = vld [vmem:[%s301] sm:$0xff]
          %v1439 = vld [vmem:[%s301 + $0x8] sm:$0xff]
          %vm1440 = vcmask 261120
          %v1442 = vsel %vm1440, %v1438, 0
          %v1445 = vsel %vm1440, %v1439, 0
          %1447 = vmatprep.subr.mxu0 0.0
          %1448 = vmatpush1.msra.mxu0 0.0
          %1449 = vmatprep.subr.mxu0 0.0
          %1450 = vmatpush1.msra.mxu0 0.0
          %1451 = vmatprep.subr.mxu0 0.0
          %1452 = vmatpush1.msra.mxu0 0.0
          %1453 = vmatprep.subr.mxu0 0.0
          %1454 = vmatpush1.msra.mxu0 0.0
          %1455 = vmatprep.subr.mxu0 0.0
          %1456 = vmatpush1.msra.mxu0 0.0
          %1457 = vmatprep.subr.mxu0 0.0
          %1458 = vmatpush1.msra.mxu0 0.0
          %1459 = vmatprep.subr.mxu0 0.0
          %1460 = vmatpush1.msra.mxu0 0.0
          %1461 = vmatprep.subr.mxu0 0.0
          %1462 = vmatpush1.msra.mxu0 0.0
          %1463 = vmatprep.subr.mxu0 0.0
          %1464 = vmatpush1.msra.mxu0 0.0
          %1465 = vmatprep.subr.mxu0 0.0
          %1466 = vmatpush1.msra.mxu0 0.0
          %1467 = vmatprep.subr.mxu0 0.0
          %1468 = vmatpush1.msra.mxu0 0.0
          %1469 = vmatprep.subr.mxu0 0.0
          %1470 = vmatpush1.msra.mxu0 0.0
          %1471 = vmatprep.subr.mxu0 0.0
          %1472 = vmatpush1.msra.mxu0 %v375
          %1473 = vmatprep.subr.mxu0 0.0
          %1474 = vmatpush1.msra.mxu0 %v374
          %1475 = vmatprep.subr.mxu0 0.0
          %1476 = vmatpush1.msra.mxu0 %v373
          %1477 = vmatprep.subr.mxu0 0.0
          %1478 = vmatpush1.msra.mxu0 %v372
          %1479 = vmatprep.subr.mxu0 0.0
          %1480 = vmatpush2.msra.mxu0 0.0
          %1481 = vmatprep.subr.mxu0 0.0
          %1482 = vmatpush2.msra.mxu0 0.0
          %1483 = vmatprep.subr.mxu0 0.0
          %1484 = vmatpush2.msra.mxu0 0.0
          %1485 = vmatprep.subr.mxu0 0.0
          %1486 = vmatpush2.msra.mxu0 0.0
          %1487 = vmatprep.subr.mxu0 0.0
          %1488 = vmatpush2.msra.mxu0 0.0
          %1489 = vmatprep.subr.mxu0 0.0
          %1490 = vmatpush2.msra.mxu0 0.0
          %1491 = vmatprep.subr.mxu0 0.0
          %1492 = vmatpush2.msra.mxu0 0.0
          %1493 = vmatprep.subr.mxu0 0.0
          %1494 = vmatpush2.msra.mxu0 0.0
          %1495 = vmatprep.subr.mxu0 0.0
          %1496 = vmatpush2.msra.mxu0 0.0
          %1497 = vmatprep.subr.mxu0 0.0
          %1498 = vmatpush2.msra.mxu0 0.0
          %1499 = vmatprep.subr.mxu0 0.0
          %1500 = vmatpush2.msra.mxu0 0.0
          %1501 = vmatprep.subr.mxu0 0.0
          %1502 = vmatpush2.msra.mxu0 0.0
          %1503 = vmatprep.subr.mxu0 0.0
          %1504 = vmatpush2.msra.mxu0 0.0
          %1505 = vmatprep.subr.mxu0 0.0
          %1506 = vmatpush2.msra.mxu0 0.0
          %1507 = vmatprep.subr.mxu0 0.0
          %1508 = vmatpush2.msra.mxu0 0.0
          %1509 = vmatprep.subr.mxu0 0.0
          %1510 = vmatpush2.msra.mxu0 0.0
          %1511 = vmatprep.mubr.f32.mxu0 0.0
          %1512 = vmatmul.mubr.f32.gmra.mxu0 %v1442
          %v1513 = vpop.f32.mrf.mxu0
          %v1514 = vadd.f32 0.0, %v1513
          %v1515 = vpop.f32.mrf.mxu0
          %1516 = vmatprep.mubr.f32.mxu0 0.0
          %1517 = vmatmul.mubr.f32.gmra.mxu0 %v1445
          %v1518 = vpop.f32.mrf.mxu0
          %v1519 = vadd.f32 0.0, %v1518
          %v1520 = vpop.f32.mrf.mxu0
          %1521 = vdwg.mxu0
          %v1522 = vsel %vm378, 1, 0
          %vm1523 = vcmp.eq.s32.totalorder %v1522, 1
          %v1524 = vsel %vm1523, %v1514, -1e+30
          %v1525 = vsel %vm1523, %v1519, -1e+30
          %v1526 = vmul.f32 %v1438, %v1438
          %v1527 = vmul.f32 %v1439, %v1439
          %v1528 = vsel %vm1440, %v1526, 0.0
          %1529 = vadd.xlane.f32.xlu0 %v1528
          %v1530 = vpop.xlane.xlu0 %1529
          %v1531 = vsel %vm1440, %v1527, 0.0
          %1532 = vadd.xlane.f32.xlu0 %v1531
          %v1533 = vpop.xlane.xlu0 %1532
          %v1534 = vmul.f32 %v1530, 0.088388346
          %v1535 = vmul.f32 %v1533, 0.088388346
          %1536 = vmax.xlane.f32.xlu0 %v1524
          %v1537 = vpop.xlane.xlu0 %1536
          %1538 = vmax.xlane.f32.xlu0 %v1525
          %v1539 = vpop.xlane.xlu0 %1538
          %v1540 = vsel %vm378, 9.534626e-06, 0.0
          %v1541 = vadd.f32 %v1534, %v1537
          %v1542 = vadd.f32 %v1535, %v1539
          %v1543 = vsub.f32 %v1541, -2.3502402
          %v1544 = vsub.f32 %v1542, -2.3502402
          %v1545 = vsub.f32 %v1524, %v1543
          %v1546 = vsub.f32 %v1525, %v1544
          %v1547 = vmul.f32 %v1545, 1.442695
          %v1548 = vpow.pop %v1547
          %v1549 = vmul.f32 %v1546, 1.442695
          %v1550 = vpow.pop %v1549
          %v1551 = vadd.f32 %v1548, %v1540
          %v1552 = vadd.f32 %v1550, %v1540
          %v1553 = vld [vmem:[#allocation2] sm:$0xff]
          %v1554 = vld [vmem:[#allocation2 + $0x8] sm:$0xff]
          %v1555 = vld [vmem:[#allocation2 + $0x10] sm:$0xff]
          %v1556 = vld [vmem:[#allocation2 + $0x18] sm:$0xff]
          %v1557 = vld [vmem:[#allocation2 + $0x20] sm:$0xff]
          %v1558 = vld [vmem:[#allocation2 + $0x28] sm:$0xff]
          %v1559 = vld [vmem:[#allocation2 + $0x30] sm:$0xff]
          %v1560 = vld [vmem:[#allocation2 + $0x38] sm:$0xff]
          %v1561 = vld [vmem:[#allocation2 + $0x40] sm:$0xff]
          %v1562 = vld [vmem:[#allocation2 + $0x48] sm:$0xff]
          %v1563 = vld [vmem:[#allocation2 + $0x50] sm:$0xff]
          %v1564 = vld [vmem:[#allocation2 + $0x58] sm:$0xff]
          %v1565 = vld [vmem:[#allocation2 + $0x60] sm:$0xff]
          %v1566 = vld [vmem:[#allocation2 + $0x68] sm:$0xff]
          %v1567 = vld [vmem:[#allocation2 + $0x70] sm:$0xff]
          %v1568 = vld [vmem:[#allocation2 + $0x78] sm:$0xff]
          %v1569 = vld [vmem:[#allocation2 + $0x80] sm:$0xff]
          %v1570 = vld [vmem:[#allocation2 + $0x88] sm:$0xff]
          %v1571 = vld [vmem:[#allocation2 + $0x90] sm:$0xff]
          %v1572 = vld [vmem:[#allocation2 + $0x98] sm:$0xff]
          %v1573 = vld [vmem:[#allocation2 + $0xa0] sm:$0xff]
          %v1574 = vld [vmem:[#allocation2 + $0xa8] sm:$0xff]
          %v1575 = vld [vmem:[#allocation2 + $0xb0] sm:$0xff]
          %v1576 = vld [vmem:[#allocation2 + $0xb8] sm:$0xff]
          %v1577 = vld [vmem:[#allocation2 + $0xc0] sm:$0xff]
          %v1578 = vld [vmem:[#allocation2 + $0xc8] sm:$0xff]
          %v1579 = vld [vmem:[#allocation2 + $0xd0] sm:$0xff]
          %v1580 = vld [vmem:[#allocation2 + $0xd8] sm:$0xff]
          %v1581 = vld [vmem:[#allocation2 + $0xe0] sm:$0xff]
          %v1582 = vld [vmem:[#allocation2 + $0xe8] sm:$0xff]
          %v1583 = vld [vmem:[#allocation2 + $0xf0] sm:$0xff]
          %v1584 = vld [vmem:[#allocation2 + $0xf8] sm:$0xff]
          %1585 = vmatprep.subr.mxu0 0.0
          %1586 = vmatpush1.msra.mxu0 %v1568
          %1587 = vmatprep.subr.mxu0 0.0
          %1588 = vmatpush1.msra.mxu0 %v1567
          %1589 = vmatprep.subr.mxu0 0.0
          %1590 = vmatpush1.msra.mxu0 %v1566
          %1591 = vmatprep.subr.mxu0 0.0
          %1592 = vmatpush1.msra.mxu0 %v1565
          %1593 = vmatprep.subr.mxu0 0.0
          %1594 = vmatpush1.msra.mxu0 %v1564
          %1595 = vmatprep.subr.mxu0 0.0
          %1596 = vmatpush1.msra.mxu0 %v1563
          %1597 = vmatprep.subr.mxu0 0.0
          %1598 = vmatpush1.msra.mxu0 %v1562
          %1599 = vmatprep.subr.mxu0 0.0
          %1600 = vmatpush1.msra.mxu0 %v1561
          %1601 = vmatprep.subr.mxu0 0.0
          %1602 = vmatpush1.msra.mxu0 %v1560
          %1603 = vmatprep.subr.mxu0 0.0
          %1604 = vmatpush1.msra.mxu0 %v1559
          %1605 = vmatprep.subr.mxu0 0.0
          %1606 = vmatpush1.msra.mxu0 %v1558
          %1607 = vmatprep.subr.mxu0 0.0
          %1608 = vmatpush1.msra.mxu0 %v1557
          %1609 = vmatprep.subr.mxu0 0.0
          %1610 = vmatpush1.msra.mxu0 %v1556
          %1611 = vmatprep.subr.mxu0 0.0
          %1612 = vmatpush1.msra.mxu0 %v1555
          %1613 = vmatprep.subr.mxu0 0.0
          %1614 = vmatpush1.msra.mxu0 %v1554
          %1615 = vmatprep.subr.mxu0 0.0
          %1616 = vmatpush1.msra.mxu0 %v1553
          %1617 = vmatprep.subr.mxu0 0.0
          %1618 = vmatpush2.msra.mxu0 0.0
          %1619 = vmatprep.subr.mxu0 0.0
          %1620 = vmatpush2.msra.mxu0 0.0
          %1621 = vmatprep.subr.mxu0 0.0
          %1622 = vmatpush2.msra.mxu0 0.0
          %1623 = vmatprep.subr.mxu0 0.0
          %1624 = vmatpush2.msra.mxu0 0.0
          %1625 = vmatprep.subr.mxu0 0.0
          %1626 = vmatpush2.msra.mxu0 0.0
          %1627 = vmatprep.subr.mxu0 0.0
          %1628 = vmatpush2.msra.mxu0 0.0
          %1629 = vmatprep.subr.mxu0 0.0
          %1630 = vmatpush2.msra.mxu0 0.0
          %1631 = vmatprep.subr.mxu0 0.0
          %1632 = vmatpush2.msra.mxu0 0.0
          %1633 = vmatprep.subr.mxu0 0.0
          %1634 = vmatpush2.msra.mxu0 0.0
          %1635 = vmatprep.subr.mxu0 0.0
          %1636 = vmatpush2.msra.mxu0 0.0
          %1637 = vmatprep.subr.mxu0 0.0
          %1638 = vmatpush2.msra.mxu0 0.0
          %1639 = vmatprep.subr.mxu0 0.0
          %1640 = vmatpush2.msra.mxu0 0.0
          %1641 = vmatprep.subr.mxu0 0.0
          %1642 = vmatpush2.msra.mxu0 0.0
          %1643 = vmatprep.subr.mxu0 0.0
          %1644 = vmatpush2.msra.mxu0 0.0
          %1645 = vmatprep.subr.mxu0 0.0
          %1646 = vmatpush2.msra.mxu0 0.0
          %1647 = vmatprep.subr.mxu0 0.0
          %1648 = vmatpush2.msra.mxu0 0.0
          %1649 = vmatprep.mubr.f32.mxu0 0.0
          %1650 = vmatmul.mubr.f32.gmra.mxu0 %v1551
          %v1651 = vpop.f32.mrf.mxu0
          %v1652 = vadd.f32 0.0, %v1651
          %v1653 = vpop.f32.mrf.mxu0
          %1654 = vdwg.mxu0
          %1655 = vmatprep.subr.mxu0 0.0
          %1656 = vmatpush1.msra.mxu0 %v1584
          %1657 = vmatprep.subr.mxu0 0.0
          %1658 = vmatpush1.msra.mxu0 %v1583
          %1659 = vmatprep.subr.mxu0 0.0
          %1660 = vmatpush1.msra.mxu0 %v1582
          %1661 = vmatprep.subr.mxu0 0.0
          %1662 = vmatpush1.msra.mxu0 %v1581
          %1663 = vmatprep.subr.mxu0 0.0
          %1664 = vmatpush1.msra.mxu0 %v1580
          %1665 = vmatprep.subr.mxu0 0.0
          %1666 = vmatpush1.msra.mxu0 %v1579
          %1667 = vmatprep.subr.mxu0 0.0
          %1668 = vmatpush1.msra.mxu0 %v1578
          %1669 = vmatprep.subr.mxu0 0.0
          %1670 = vmatpush1.msra.mxu0 %v1577
          %1671 = vmatprep.subr.mxu0 0.0
          %1672 = vmatpush1.msra.mxu0 %v1576
          %1673 = vmatprep.subr.mxu0 0.0
          %1674 = vmatpush1.msra.mxu0 %v1575
          %1675 = vmatprep.subr.mxu0 0.0
          %1676 = vmatpush1.msra.mxu0 %v1574
          %1677 = vmatprep.subr.mxu0 0.0
          %1678 = vmatpush1.msra.mxu0 %v1573
          %1679 = vmatprep.subr.mxu0 0.0
          %1680 = vmatpush1.msra.mxu0 %v1572
          %1681 = vmatprep.subr.mxu0 0.0
          %1682 = vmatpush1.msra.mxu0 %v1571
          %1683 = vmatprep.subr.mxu0 0.0
          %1684 = vmatpush1.msra.mxu0 %v1570
          %1685 = vmatprep.subr.mxu0 0.0
          %1686 = vmatpush1.msra.mxu0 %v1569
          %1687 = vmatprep.subr.mxu0 0.0
          %1688 = vmatpush2.msra.mxu0 0.0
          %1689 = vmatprep.subr.mxu0 0.0
          %1690 = vmatpush2.msra.mxu0 0.0
          %1691 = vmatprep.subr.mxu0 0.0
          %1692 = vmatpush2.msra.mxu0 0.0
          %1693 = vmatprep.subr.mxu0 0.0
          %1694 = vmatpush2.msra.mxu0 0.0
          %1695 = vmatprep.subr.mxu0 0.0
          %1696 = vmatpush2.msra.mxu0 0.0
          %1697 = vmatprep.subr.mxu0 0.0
          %1698 = vmatpush2.msra.mxu0 0.0
          %1699 = vmatprep.subr.mxu0 0.0
          %1700 = vmatpush2.msra.mxu0 0.0
          %1701 = vmatprep.subr.mxu0 0.0
          %1702 = vmatpush2.msra.mxu0 0.0
          %1703 = vmatprep.subr.mxu0 0.0
          %1704 = vmatpush2.msra.mxu0 0.0
          %1705 = vmatprep.subr.mxu0 0.0
          %1706 = vmatpush2.msra.mxu0 0.0
          %1707 = vmatprep.subr.mxu0 0.0
          %1708 = vmatpush2.msra.mxu0 0.0
          %1709 = vmatprep.subr.mxu0 0.0
          %1710 = vmatpush2.msra.mxu0 0.0
          %1711 = vmatprep.subr.mxu0 0.0
          %1712 = vmatpush2.msra.mxu0 0.0
          %1713 = vmatprep.subr.mxu0 0.0
          %1714 = vmatpush2.msra.mxu0 0.0
          %1715 = vmatprep.subr.mxu0 0.0
          %1716 = vmatpush2.msra.mxu0 0.0
          %1717 = vmatprep.subr.mxu0 0.0
          %1718 = vmatpush2.msra.mxu0 0.0
          %1719 = vmatprep.mubr.f32.mxu0 0.0
          %1720 = vmatmul.mubr.f32.gmra.mxu0 %v1552
          %v1721 = vpop.f32.mrf.mxu0
          %v1722 = vadd.f32 0.0, %v1721
          %v1723 = vpop.f32.mrf.mxu0
          %1724 = vdwg.mxu0
          %vm1725 = vcmp.eq.f32.partialorder %v1652, 0.0
          %vm1726 = vcmp.eq.f32.partialorder %v1722, 0.0
          %v1727 = vsel %vm1725, 1e-05, %v1652
          %v1728 = vsel %vm1726, 1e-05, %v1722
          %v1729 = vrcp.pop %v1727
          %v1730 = vmul.f32 1.0, %v1729
          %v1731 = vrcp.pop %v1728
          %v1732 = vmul.f32 1.0, %v1731
          %1734 = vset.pattern.permute.xlu0 32
          %1735 = vperm.xlu0 %1734, %v1730
          %v1736 = vpop.permute.xlu0 %1735
          %1739 = vset.pattern.permute.xlu0 32
          %1740 = vperm.xlu0 %1739, %v1732
          %v1741 = vpop.permute.xlu0 %1740
          %v1743 = vmul.f32 %v1652, %v1736
          %v1744 = vmul.f32 %v1722, %v1741
          %1745 = vst.msk [vmem:[%s357] sm:$0xff] %vm1440, %v1743
          %1746 = vst.msk [vmem:[%s357 + $0x8] sm:$0xff] %vm1440, %v1744
        $region68: #{tpu_custom_call.1} parent=35 // pred_fallthru
          _
        %s1747 = sand.u32 %s172, 1
        %s1748 = scalar_lea.sflag [#allocation7], %s1747
        %s1749 = sand.u32 %s172, 1
        %s1750 = smul.addr %s1749, 16
        %s1751 = scalar_lea.vmem [#allocation13], %s1750
        // Predicated region
        $region69: #{tpu_custom_call.1} parent=35 // pred_check
          %p1752 = pneg %p182
        $region70: #{tpu_custom_call.1} parent=35 // pred_check_branch
          %1754 = sbr.rel (%p1752) target = $region72
        $region71: #{tpu_custom_call.1} parent=35 // pred_region
          %s1755 = ssub.s32 %s30, 1
          %p1756 = scmp.gt.s32.totalorder %s1755, 0
          %s1757 = scalar_select %p1756, %s1755, 0
          %s1758 = smul.u32 2, %s29
          %s1760 = ssub.s32 256, 256
          %1761 = vsyncadd %s1748, %s1760
          %s1762 = sadd.s32 %s1757, %s1758
          %s1763 = smul.addr %s1762, 128
          %s1764 = scalar_lea.hbm %s4, %s1763
          %s1765 = sshll.u32 %s1751, 4
          %s1766 = int_to_ptr.vmem [resolvable:$true] %s1765
          %1771 = dma.vmem_to_hbm [thread:$0]  %s1766, 256, %s1764, %s1748, 128, 128, 8
        $region72: #{tpu_custom_call.1} parent=35 // pred_fallthru
          _
      $region36: #{tpu_custom_call.1} parent=5 // pred_fallthru
        _
      %p1772 = scmp.le.s32.totalorder 2, %s20
      // Predicated region
      $region73: #{tpu_custom_call.1} parent=5 // pred_check
        %p1773 = pneg %p1772
      $region74: #{tpu_custom_call.1} parent=5 // pred_check_branch
        %1775 = sbr.rel (%p1773) target = $region76
      $region75: #{tpu_custom_call.1} parent=5 // pred_region
        %s1776 = ssub.s32 %s20, 2
        // Predicated region
        $region77: #{tpu_custom_call.1} parent=75 // pred_check
          %p1777 = pneg %p188
        $region78: #{tpu_custom_call.1} parent=75 // pred_check_branch
          %1779 = sbr.rel (%p1777) target = $region80
        $region79: #{tpu_custom_call.1} parent=75 // pred_region
          %s1780 = sand.u32 %s173, 1
          %s1781 = scalar_lea.sflag [#allocation7], %s1780
          %s1782 = sand.u32 %s173, 1
          %s1783 = smul.addr %s1782, 16
          %s1784 = scalar_lea.vmem [#allocation13], %s1783
          %1785 = dma.done %s1781, 256
        $region80: #{tpu_custom_call.1} parent=75 // pred_fallthru
          _
      $region76: #{tpu_custom_call.1} parent=5 // pred_fallthru
        _
    $region6: #{tpu_custom_call.1} parent=1 // loop_footer
      %s24 = sadd.s32 1, %s20
    $region7: #{tpu_custom_call.1} parent=1 // loop_footer_branch
      %19 = sbr.rel target = $region3
    $region8: #{tpu_custom_call.1} parent=1 // loop_exit
      _
    %1786 = vsyncpa [#allocation6], 1
    %s1787 = scalar_lea.sflag [#allocation6], 1
    %1788 = vsyncpa %s1787, 1
    %1789 = vsyncpa [#allocation9], 1
    %s1790 = scalar_lea.sflag [#allocation9], 1
    %1791 = vsyncpa %s1790, 1
    %1792 = vsyncpa [#allocation12], 1
    %1793 = vsyncpa [#allocation7], 1
    %s1794 = scalar_lea.sflag [#allocation7], 1
    %1795 = vsyncpa %s1794, 1

</llo_original>
